<compile_context>
chip_gen: v7x
topology: tpu7x:2x2x1
jax: 0.10.0
libtpu: 0.0.40
codegen_flags: <defaults>
</compile_context>

<pallas_src>
import functools

import jax
import jax.numpy as jnp
import numpy as np
from jax.experimental import pallas as pl
from jax.experimental.pallas import tpu as pltpu


def _channel_attention_kernel(x_ref, w1_ref, w2_ref, o_ref, *, inv_hw):
    # x_ref : VMEM [Nb, C, HW]  input block, native dtype
    # w1_ref: VMEM [C,  Ch]     fc1 weight, pre-transposed, f32
    # w2_ref: VMEM [Ch, C]      fc2 weight, pre-transposed, f32
    # o_ref : VMEM [Nb, C]      sigmoid(channel attention), f32
    x = x_ref[...].astype(jnp.float32)                       # (Nb, C, HW)

    # Global spatial pooling: reduce the lane-dense HW axis.
    avg = jnp.sum(x, axis=-1) * inv_hw                       # (Nb, C)
    mx = jnp.max(x, axis=-1)                                 # (Nb, C)

    w1 = w1_ref[...]                                         # (C, Ch)
    w2 = w2_ref[...]                                         # (Ch, C)

    # fc1 + ReLU on both pooled vectors (1x1 conv == channel matmul).
    h_avg = jnp.maximum(
        jnp.dot(avg, w1, preferred_element_type=jnp.float32,
                precision=jax.lax.Precision.HIGHEST), 0.0)   # (Nb, Ch)
    h_max = jnp.maximum(
        jnp.dot(mx, w1, preferred_element_type=jnp.float32,
                precision=jax.lax.Precision.HIGHEST), 0.0)   # (Nb, Ch)

    # fc2 has no bias -> fc2(h_avg) + fc2(h_max) == (h_avg + h_max) @ W2.
    y = jnp.dot(h_avg + h_max, w2, preferred_element_type=jnp.float32,
                precision=jax.lax.Precision.HIGHEST)         # (Nb, C)

    o_ref[...] = jax.nn.sigmoid(y)


def _pick_batch_block(n, c, hw, itemsize, vmem_budget_bytes=12 * 1024 * 1024):
    """Largest batch block whose double-buffered input tile fits the budget."""
    per_elem = 2 * c * hw * itemsize                 # x2: double buffering
    nb = max(1, vmem_budget_bytes // max(per_elem, 1))
    if nb >= n:
        return n                                     # whole batch, one grid step
    # Keep the output block's second-to-last dim a multiple of 8 (layout rule).
    return max(8, (nb // 8) * 8)


def channel_attention(x, fc1_w, fc2_w):
    """x: [N, C, H, W]; fc1_w: [C//r, C, 1, 1]; fc2_w: [C, C//r, 1, 1] (OIHW).

    Returns the sigmoid channel-attention map, shape [N, C, 1, 1], float32.
    """
    N, C, H, W = x.shape
    Ch = fc1_w.shape[0]
    assert fc1_w.shape == (Ch, C, 1, 1)
    assert fc2_w.shape == (C, Ch, 1, 1)

    HW = H * W
    x_flat = x.reshape(N, C, HW)                     # lane-dense last dim

    # Pre-transpose the 1x1-conv weights so the kernel runs plain row-major
    # matmuls with no in-kernel transposes.
    w1_t = fc1_w.reshape(Ch, C).T.astype(jnp.float32)   # (C, Ch)
    w2_t = fc2_w.reshape(C, Ch).T.astype(jnp.float32)   # (Ch, C)

    Nb = _pick_batch_block(N, C, HW, x.dtype.itemsize)
    grid = (pl.cdiv(N, Nb),)

    kernel = functools.partial(_channel_attention_kernel, inv_hw=1.0 / HW)

    out = pl.pallas_call(
        kernel,
        out_shape=jax.ShapeDtypeStruct((N, C), jnp.float32),
        grid=grid,
        in_specs=[
            pl.BlockSpec((Nb, C, HW), lambda b: (b, 0, 0)),  # x, per batch block
            pl.BlockSpec((C, Ch), lambda b: (0, 0)),         # fc1^T, VMEM-resident
            pl.BlockSpec((Ch, C), lambda b: (0, 0)),         # fc2^T, VMEM-resident
        ],
        out_specs=pl.BlockSpec((Nb, C), lambda b: (b, 0)),
        compiler_params=pltpu.CompilerParams(
            dimension_semantics=("parallel",)),              # batch rows independent
    )(x_flat, w1_t, w2_t)

    return out.reshape(N, C, 1, 1)


def _reference(x, fc1_w, fc2_w):
    N, C, H, W = x.shape
    Ch = fc1_w.shape[0]
    xf = x.astype(jnp.float32)
    avg = jnp.mean(xf, axis=(2, 3))                  # (N, C)
    mx = jnp.max(xf, axis=(2, 3))                    # (N, C)
    w1 = fc1_w.reshape(Ch, C).astype(jnp.float32)
    w2 = fc2_w.reshape(C, Ch).astype(jnp.float32)

    def mlp(v):
        h = jnp.maximum(
            jnp.dot(v, w1.T, precision=jax.lax.Precision.HIGHEST), 0.0)
        return jnp.dot(h, w2.T, precision=jax.lax.Precision.HIGHEST)

    return jax.nn.sigmoid(mlp(avg) + mlp(mx)).reshape(N, C, 1, 1)


if __name__ == "__main__":
    key = jax.random.PRNGKey(0)
    kx, k1, k2 = jax.random.split(key, 3)

    # The module hardcodes a //16 bottleneck, so in_planes must be >= 16.
    N, C, H, W = 2, 32, 16, 16
    Ch = C // 16

    x = jax.random.normal(kx, (N, C, H, W), dtype=jnp.float32)

    # Deterministic Conv2d(..., 1, bias=False) kaiming-uniform-like init.
    b1 = 1.0 / np.sqrt(C)
    fc1_w = jax.random.uniform(k1, (Ch, C, 1, 1), jnp.float32,
                               minval=-b1, maxval=b1)
    b2 = 1.0 / np.sqrt(Ch)
    fc2_w = jax.random.uniform(k2, (C, Ch, 1, 1), jnp.float32,
                               minval=-b2, maxval=b2)

    out = channel_attention(x, fc1_w, fc2_w)
    out = jax.block_until_ready(out)

    ref = _reference(x, fc1_w, fc2_w)
    assert out.shape == (N, C, 1, 1)
    np.testing.assert_allclose(np.asarray(out), np.asarray(ref),
                               atol=1e-5, rtol=1e-5)

    print("KERNEL_OK")
</pallas_src>

<mosaic_0001>
module attributes {stable_mosaic.version = 11 : i64} {
  func.func @_channel_attention_kernel(%arg0: i32, %arg1: memref<2x32x256xf32, #tpu.memory_space<vmem>>, %arg2: memref<32x2xf32, #tpu.memory_space<vmem>>, %arg3: memref<2x32xf32, #tpu.memory_space<vmem>>, %arg4: memref<2x32xf32, #tpu.memory_space<vmem>>) attributes {dimension_semantics = [#tpu.dimension_semantics<parallel>], iteration_bounds = array<i64: 1>, scalar_prefetch = 0 : i64, scratch_operands = 0 : i64, tpu.core_type = #tpu.core_type<tc>, window_params = [{transform_indices = @transform_0, window_bounds = array<i64: 2, 32, 256>}, {pipeline_mode = #tpu.pipeline_mode<synchronous>, transform_indices = @transform_1, window_bounds = array<i64: 32, 2>}, {pipeline_mode = #tpu.pipeline_mode<synchronous>, transform_indices = @transform_2, window_bounds = array<i64: 2, 32>}, {transform_indices = @transform_3, window_bounds = array<i64: 2, 32>}]} {
    %c0 = arith.constant 0 : index
    %c0_0 = arith.constant 0 : index
    %c0_1 = arith.constant 0 : index
    %0 = vector.load %arg1[%c0, %c0_0, %c0_1] : memref<2x32x256xf32, #tpu.memory_space<vmem>>, vector<2x32x256xf32>
    %cst = arith.constant dense<0.000000e+00> : vector<2x32xf32>
    %1 = vector.multi_reduction <add>, %0, %cst [2] : vector<2x32x256xf32> to vector<2x32xf32>
    %cst_2 = arith.constant 3.906250e-03 : f32
    %2 = vector.broadcast %cst_2 : f32 to vector<2x32xf32>
    %3 = arith.mulf %1, %2 : vector<2x32xf32>
    %cst_3 = arith.constant dense<0xFF800000> : vector<2x32xf32>
    %4 = vector.multi_reduction <maximumf>, %0, %cst_3 [2] : vector<2x32x256xf32> to vector<2x32xf32>
    %c0_4 = arith.constant 0 : index
    %c0_5 = arith.constant 0 : index
    %5 = vector.load %arg2[%c0_4, %c0_5] : memref<32x2xf32, #tpu.memory_space<vmem>>, vector<32x2xf32>
    %c0_6 = arith.constant 0 : index
    %c0_7 = arith.constant 0 : index
    %6 = vector.load %arg3[%c0_6, %c0_7] : memref<2x32xf32, #tpu.memory_space<vmem>>, vector<2x32xf32>
    %cst_8 = arith.constant dense<0.000000e+00> : vector<2x2xf32>
    %7 = tpu.matmul %3, %5, %cst_8 {dimension_numbers = #tpu.dot_dimension_numbers<[1], [0], [0], [1], [0, 0, 1, 1], [], []>, precision = #tpu.contract_precision<fp32>} : vector<2x32xf32>, vector<32x2xf32>, vector<2x2xf32> -> vector<2x2xf32>
    %cst_9 = arith.constant 0.000000e+00 : f32
    %8 = vector.broadcast %cst_9 : f32 to vector<2x2xf32>
    %9 = arith.maximumf %7, %8 : vector<2x2xf32>
    %cst_10 = arith.constant dense<0.000000e+00> : vector<2x2xf32>
    %10 = tpu.matmul %4, %5, %cst_10 {dimension_numbers = #tpu.dot_dimension_numbers<[1], [0], [0], [1], [0, 0, 1, 1], [], []>, precision = #tpu.contract_precision<fp32>} : vector<2x32xf32>, vector<32x2xf32>, vector<2x2xf32> -> vector<2x2xf32>
    %cst_11 = arith.constant 0.000000e+00 : f32
    %11 = vector.broadcast %cst_11 : f32 to vector<2x2xf32>
    %12 = arith.maximumf %10, %11 : vector<2x2xf32>
    %13 = arith.addf %9, %12 : vector<2x2xf32>
    %cst_12 = arith.constant dense<0.000000e+00> : vector<2x32xf32>
    %14 = tpu.matmul %13, %6, %cst_12 {dimension_numbers = #tpu.dot_dimension_numbers<[1], [0], [0], [1], [0, 0, 1, 1], [], []>, precision = #tpu.contract_precision<fp32>} : vector<2x2xf32>, vector<2x32xf32>, vector<2x32xf32> -> vector<2x32xf32>
    %15 = arith.negf %14 : vector<2x32xf32>
    %16 = math.exp %15 : vector<2x32xf32>
    %cst_13 = arith.constant 1.000000e+00 : f32
    %17 = vector.broadcast %cst_13 : f32 to vector<2x32xf32>
    %18 = arith.addf %17, %16 : vector<2x32xf32>
    %19 = arith.divf %17, %18 : vector<2x32xf32>
    %c0_14 = arith.constant 0 : index
    %c0_15 = arith.constant 0 : index
    %20 = vector.load %arg4[%c0_14, %c0_15] : memref<2x32xf32, #tpu.memory_space<vmem>>, vector<2x32xf32>
    tpu.vector_store %arg4[%c0_14, %c0_15], %19 {strides = array<i32>} : memref<2x32xf32, #tpu.memory_space<vmem>>, vector<2x32xf32>,
    return
  }
  func.func @transform_0(%arg0: i32) -> (i32, i32, i32) {
    %c0_i32 = arith.constant 0 : i32
    %c0_i32_0 = arith.constant 0 : i32
    %c0_i32_1 = arith.constant 0 : i32
    return %arg0, %c0_i32, %c0_i32_0 : i32, i32, i32
  }
  func.func @transform_1(%arg0: i32) -> (i32, i32) {
    %c0_i32 = arith.constant 0 : i32
    %c0_i32_0 = arith.constant 0 : i32
    %c0_i32_1 = arith.constant 0 : i32
    return %c0_i32, %c0_i32_0 : i32, i32
  }
  func.func @transform_2(%arg0: i32) -> (i32, i32) {
    %c0_i32 = arith.constant 0 : i32
    %c0_i32_0 = arith.constant 0 : i32
    %c0_i32_1 = arith.constant 0 : i32
    return %c0_i32, %c0_i32_0 : i32, i32
  }
  func.func @transform_3(%arg0: i32) -> (i32, i32) {
    %c0_i32 = arith.constant 0 : i32
    %c0_i32_0 = arith.constant 0 : i32
    return %arg0, %c0_i32 : i32, i32
  }
}

</mosaic_0001>

<llo_original>
// kernel: tpu_custom_call.1
$region0: #{tpu_custom_call.1}
  #allocation0 [shape = 'u32[]', space=smem, size = 0x4, offset = 0x4, fixed_abs, tag = 'smem constant byte address 0x4 - core index']
  #allocation1 [shape = 'u32[144,128]{1,0:T(1,128)}', space=vmem, size = 0x12000, scoped, tag = 'internal scratch']
  %s0 = inlined_call_operand.hbm [shape: f32[2,32,256], index: 0, kind: input, shape index: {}]
  %s1 = inlined_call_operand.vmem [shape: f32[32,2], index: 1, kind: input, shape index: {}]
  %s2 = inlined_call_operand.vmem [shape: f32[2,32], index: 2, kind: input, shape index: {}]
  %s3 = inlined_call_operand.hbm [shape: f32[2,32], index: 3, kind: output, shape index: {}]
  %s4 = sld [smem:[#allocation0]]
  $region26: #{tpu_custom_call.1} parent=0
    _
  %s6 = ssub.s32 1, %s4
  %s7 = scalar_select 0, %s6, %s4
  $region1: #{tpu_custom_call.1} parent=0
    #allocation2 [shape = 'u8[65536]{0}', space=vmem, size = 0x10000, scoped, tag = 'input window, operand 0, single buffered']
    #allocation3 [shape = 's32[1]{0}', space=sflag, size = 0x4, scoped, tag = 'scoped memory for tpu_custom_call.1']
    #allocation4 [shape = 's32[1]{0}', space=sflag, size = 0x4, scoped, tag = 'scoped memory for tpu_custom_call.1']
    #allocation5 [shape = 'u8[1024]{0}', space=vmem, size = 0x400, scoped, tag = 'output window, operand 0, single buffered']
    %8 = vsyncpa [#allocation3], 0
    %9 = vsyncpa [#allocation4], 0
    // Predicated region
    $region2: #{tpu_custom_call.1} parent=1 // pred_check
      _
    $region3: #{tpu_custom_call.1} parent=1 // pred_check_branch
      %11 = sbr.rel (0) target = $region5
    $region4: #{tpu_custom_call.1} parent=1 // pred_region
      %s13 = ssub.s32 2048, 2048
      %14 = vsyncadd [#allocation3], %s13
      %s15 = sshll.u32 [#allocation2], 4
      %s16 = int_to_ptr.vmem [resolvable:$true] %s15
      %21 = dma.hbm_to_vmem [thread:$0]  %s0, 2048, %s16, [#allocation3], 256, 256, 16
    $region5: #{tpu_custom_call.1} parent=1 // pred_fallthru
      _
    // Predicated region
    $region6: #{tpu_custom_call.1} parent=1 // pred_check
      _
    $region7: #{tpu_custom_call.1} parent=1 // pred_check_branch
      %23 = sbr.rel (0) target = $region9
    $region8: #{tpu_custom_call.1} parent=1 // pred_region
      _
    $region9: #{tpu_custom_call.1} parent=1 // pred_fallthru
      _
    // Predicated region
    $region10: #{tpu_custom_call.1} parent=1 // pred_check
      _
    $region11: #{tpu_custom_call.1} parent=1 // pred_check_branch
      %25 = sbr.rel (0) target = $region13
    $region12: #{tpu_custom_call.1} parent=1 // pred_region
      _
    $region13: #{tpu_custom_call.1} parent=1 // pred_fallthru
      _
    // Predicated region
    $region14: #{tpu_custom_call.1} parent=1 // pred_check
      _
    $region15: #{tpu_custom_call.1} parent=1 // pred_check_branch
      %27 = sbr.rel (0) target = $region17
    $region16: #{tpu_custom_call.1} parent=1 // pred_region
      %28 = dma.done [#allocation3], 2048
    $region17: #{tpu_custom_call.1} parent=1 // pred_fallthru
      _
    %v29 = vld [vmem:[#allocation2] sm:$0xff]
    %v30 = vld [vmem:[#allocation2 + $0x8] sm:$0xff]
    %v31 = vld [vmem:[#allocation2 + $0x10] sm:$0xff]
    %v32 = vld [vmem:[#allocation2 + $0x18] sm:$0xff]
    %v33 = vld [vmem:[#allocation2 + $0x20] sm:$0xff]
    %v34 = vld [vmem:[#allocation2 + $0x28] sm:$0xff]
    %v35 = vld [vmem:[#allocation2 + $0x30] sm:$0xff]
    %v36 = vld [vmem:[#allocation2 + $0x38] sm:$0xff]
    %v37 = vld [vmem:[#allocation2 + $0x40] sm:$0xff]
    %v38 = vld [vmem:[#allocation2 + $0x48] sm:$0xff]
    %v39 = vld [vmem:[#allocation2 + $0x50] sm:$0xff]
    %v40 = vld [vmem:[#allocation2 + $0x58] sm:$0xff]
    %v41 = vld [vmem:[#allocation2 + $0x60] sm:$0xff]
    %v42 = vld [vmem:[#allocation2 + $0x68] sm:$0xff]
    %v43 = vld [vmem:[#allocation2 + $0x70] sm:$0xff]
    %v44 = vld [vmem:[#allocation2 + $0x78] sm:$0xff]
    %v45 = vadd.f32 %v29, %v30
    %46 = vadd.xlane.f32.xlu0 %v45
    %v47 = vpop.xlane.xlu0 %46
    %v48 = vadd.f32 %v31, %v32
    %49 = vadd.xlane.f32.xlu0 %v48
    %v50 = vpop.xlane.xlu0 %49
    %v51 = vadd.f32 %v33, %v34
    %52 = vadd.xlane.f32.xlu0 %v51
    %v53 = vpop.xlane.xlu0 %52
    %v54 = vadd.f32 %v35, %v36
    %55 = vadd.xlane.f32.xlu0 %v54
    %v56 = vpop.xlane.xlu0 %55
    %v57 = vadd.f32 %v37, %v38
    %58 = vadd.xlane.f32.xlu0 %v57
    %v59 = vpop.xlane.xlu0 %58
    %v60 = vadd.f32 %v39, %v40
    %61 = vadd.xlane.f32.xlu0 %v60
    %v62 = vpop.xlane.xlu0 %61
    %v63 = vadd.f32 %v41, %v42
    %64 = vadd.xlane.f32.xlu0 %v63
    %v65 = vpop.xlane.xlu0 %64
    %v66 = vadd.f32 %v43, %v44
    %67 = vadd.xlane.f32.xlu0 %v66
    %v68 = vpop.xlane.xlu0 %67
    %v69 = vmul.f32 %v47, 0.00390625
    %v70 = vmul.f32 %v50, 0.00390625
    %v71 = vmul.f32 %v53, 0.00390625
    %v72 = vmul.f32 %v56, 0.00390625
    %v73 = vmul.f32 %v59, 0.00390625
    %v74 = vmul.f32 %v62, 0.00390625
    %v75 = vmul.f32 %v65, 0.00390625
    %v76 = vmul.f32 %v68, 0.00390625
    %v77 = vmax.f32 %v29, %v30
    %78 = vmax.xlane.f32.xlu0 %v77
    %v79 = vpop.xlane.xlu0 %78
    %v80 = vmax.f32 %v31, %v32
    %81 = vmax.xlane.f32.xlu0 %v80
    %v82 = vpop.xlane.xlu0 %81
    %v83 = vmax.f32 %v33, %v34
    %84 = vmax.xlane.f32.xlu0 %v83
    %v85 = vpop.xlane.xlu0 %84
    %v86 = vmax.f32 %v35, %v36
    %87 = vmax.xlane.f32.xlu0 %v86
    %v88 = vpop.xlane.xlu0 %87
    %v89 = vmax.f32 %v37, %v38
    %90 = vmax.xlane.f32.xlu0 %v89
    %v91 = vpop.xlane.xlu0 %90
    %v92 = vmax.f32 %v39, %v40
    %93 = vmax.xlane.f32.xlu0 %v92
    %v94 = vpop.xlane.xlu0 %93
    %v95 = vmax.f32 %v41, %v42
    %96 = vmax.xlane.f32.xlu0 %v95
    %v97 = vpop.xlane.xlu0 %96
    %v98 = vmax.f32 %v43, %v44
    %99 = vmax.xlane.f32.xlu0 %v98
    %v100 = vpop.xlane.xlu0 %99
    %v101 = vld [vmem:[%s1] sm:$0xff]
    %v102 = vld [vmem:[%s1 + $0x8] sm:$0xff]
    %v103 = vld [vmem:[%s1 + $0x10] sm:$0xff]
    %v104 = vld [vmem:[%s1 + $0x18] sm:$0xff]
    %v105 = vld [vmem:[%s2] sm:$0x3]
    %v114 = vlaneseq
    %v115 = vand.u32 %v114, 127
    %v116 = vlaneseq
    %v117 = vshrl.u32 %v116, 7
    %v118 = vsub.s32 %v115, %v117
    %v119 = vrot.slane %v69, %v118
    %v120 = vadd.s32 %v115, 4294967288
    %v121 = vlaneseq
    %v122 = vshrl.u32 %v121, 7
    %v123 = vsub.s32 %v120, %v122
    %v124 = vrot.slane %v70, %v123
    %vm125 = vcmask 130112
    %v126 = vsel %vm125, %v124, %v119
    %v127 = vadd.s32 %v115, 4294967280
    %v128 = vlaneseq
    %v129 = vshrl.u32 %v128, 7
    %v130 = vsub.s32 %v127, %v129
    %v131 = vrot.slane %v71, %v130
    %vm132 = vcmask 195712
    %v133 = vsel %vm132, %v131, %v126
    %v134 = vadd.s32 %v115, 4294967272
    %v135 = vlaneseq
    %v136 = vshrl.u32 %v135, 7
    %v137 = vsub.s32 %v134, %v136
    %v138 = vrot.slane %v72, %v137
    %vm139 = vcmask 261312
    %v140 = vsel %vm139, %v138, %v133
    %v141 = vlaneseq
    %v142 = vshrl.u32 %v141, 7
    %v143 = vsub.s32 %v115, %v142
    %v144 = vrot.slane %v73, %v143
    %v145 = vlaneseq
    %v146 = vshrl.u32 %v145, 7
    %v147 = vsub.s32 %v120, %v146
    %v148 = vrot.slane %v74, %v147
    %v149 = vsel %vm125, %v148, %v144
    %v150 = vlaneseq
    %v151 = vshrl.u32 %v150, 7
    %v152 = vsub.s32 %v127, %v151
    %v153 = vrot.slane %v75, %v152
    %v154 = vsel %vm132, %v153, %v149
    %v155 = vlaneseq
    %v156 = vshrl.u32 %v155, 7
    %v157 = vsub.s32 %v134, %v156
    %v158 = vrot.slane %v76, %v157
    %v159 = vsel %vm139, %v158, %v154
    %vm160 = vcmask 1041409
    %v161 = vsel %vm160, %v159, %v140
    %vm162 = vcmask 261120
    %v163 = vsel %vm162, %v161, 0
    %165 = vmatprep.subr.mxu0 0.0
    %v166 = vand.u32 %v101, 4294901760
    %167 = vmatpush1.msra.mxu0 %v166
    %168 = vmatprep.subr.mxu0 0.0
    %v169 = vand.u32 %v102, 4294901760
    %170 = vmatpush1.msra.mxu0 %v169
    %171 = vmatprep.subr.mxu0 0.0
    %v172 = vand.u32 %v103, 4294901760
    %173 = vmatpush1.msra.mxu0 %v172
    %174 = vmatprep.subr.mxu0 0.0
    %v175 = vand.u32 %v104, 4294901760
    %176 = vmatpush1.msra.mxu0 %v175
    %177 = vmatprep.subr.mxu0 0.0
    %178 = vmatpush1.msra.mxu0 0.0
    %179 = vmatprep.subr.mxu0 0.0
    %180 = vmatpush1.msra.mxu0 0.0
    %181 = vmatprep.subr.mxu0 0.0
    %182 = vmatpush1.msra.mxu0 0.0
    %183 = vmatprep.subr.mxu0 0.0
    %184 = vmatpush1.msra.mxu0 0.0
    %185 = vmatprep.subr.mxu0 0.0
    %186 = vmatpush1.msra.mxu0 0.0
    %187 = vmatprep.subr.mxu0 0.0
    %188 = vmatpush1.msra.mxu0 0.0
    %189 = vmatprep.subr.mxu0 0.0
    %190 = vmatpush1.msra.mxu0 0.0
    %191 = vmatprep.subr.mxu0 0.0
    %192 = vmatpush1.msra.mxu0 0.0
    %193 = vmatprep.subr.mxu0 0.0
    %194 = vmatpush1.msra.mxu0 0.0
    %195 = vmatprep.subr.mxu0 0.0
    %196 = vmatpush1.msra.mxu0 0.0
    %197 = vmatprep.subr.mxu0 0.0
    %198 = vmatpush1.msra.mxu0 0.0
    %199 = vmatprep.subr.mxu0 0.0
    %200 = vmatpush1.msra.mxu0 0.0
    %201 = vmatprep.subr.mxu0 0.0
    %202 = vmatpush1.msra.mxu0 0.0
    %203 = vmatprep.subr.mxu0 0.0
    %204 = vmatpush1.msra.mxu0 0.0
    %205 = vmatprep.subr.mxu0 0.0
    %206 = vmatpush1.msra.mxu0 0.0
    %207 = vmatprep.subr.mxu0 0.0
    %208 = vmatpush1.msra.mxu0 0.0
    %209 = vmatprep.subr.mxu0 0.0
    %210 = vmatpush1.msra.mxu0 0.0
    %211 = vmatprep.subr.mxu0 0.0
    %212 = vmatpush1.msra.mxu0 0.0
    %213 = vmatprep.subr.mxu0 0.0
    %214 = vmatpush1.msra.mxu0 0.0
    %215 = vmatprep.subr.mxu0 0.0
    %216 = vmatpush1.msra.mxu0 0.0
    %217 = vmatprep.subr.mxu0 0.0
    %218 = vmatpush1.msra.mxu0 0.0
    %219 = vmatprep.subr.mxu0 0.0
    %220 = vmatpush1.msra.mxu0 0.0
    %221 = vmatprep.subr.mxu0 0.0
    %222 = vmatpush1.msra.mxu0 0.0
    %223 = vmatprep.subr.mxu0 0.0
    %224 = vmatpush1.msra.mxu0 0.0
    %225 = vmatprep.subr.mxu0 0.0
    %226 = vmatpush1.msra.mxu0 0.0
    %227 = vmatprep.subr.mxu0 0.0
    %228 = vmatpush1.msra.mxu0 0.0
    %229 = vmatprep.subr.mxu0 0.0
    %230 = vmatpush1.msra.mxu0 0.0
    %231 = vmatprep.subr.mxu0 0.0
    %232 = vmatpush1.msra.mxu0 0.0
    %233 = vmatprep.mubr.f32.mxu0 0.0
    %v234 = vand.u32 %v163, 4294901760
    %v235 = vsub.f32 %v163, %v234
    %v236 = vand.u32 %v235, 4294901760
    %v237 = vsub.f32 %v235, %v236
    %v238 = vand.u32 %v237, 4294901760
    %239 = vmatmul.mubr.f32.gmra.mrb[0].mxu0 %v238
    %v240 = vpop.f32.mrb[0].mxu0
    %v241 = vadd.f32 0.0, %v240
    %v242 = vpop.f32.mrb[0].mxu0
    %243 = vdwg.mxu0
    %244 = vmatprep.subr.mxu0 0.0
    %v245 = vand.u32 %v101, 4294901760
    %v246 = vsub.f32 %v101, %v245
    %v247 = vand.u32 %v246, 4294901760
    %v248 = vsub.f32 %v246, %v247
    %v249 = vand.u32 %v248, 4294901760
    %250 = vmatpush1.msra.mxu0 %v249
    %251 = vmatprep.subr.mxu0 0.0
    %v252 = vand.u32 %v102, 4294901760
    %v253 = vsub.f32 %v102, %v252
    %v254 = vand.u32 %v253, 4294901760
    %v255 = vsub.f32 %v253, %v254
    %v256 = vand.u32 %v255, 4294901760
    %257 = vmatpush1.msra.mxu0 %v256
    %258 = vmatprep.subr.mxu0 0.0
    %v259 = vand.u32 %v103, 4294901760
    %v260 = vsub.f32 %v103, %v259
    %v261 = vand.u32 %v260, 4294901760
    %v262 = vsub.f32 %v260, %v261
    %v263 = vand.u32 %v262, 4294901760
    %264 = vmatpush1.msra.mxu0 %v263
    %265 = vmatprep.subr.mxu0 0.0
    %v266 = vand.u32 %v104, 4294901760
    %v267 = vsub.f32 %v104, %v266
    %v268 = vand.u32 %v267, 4294901760
    %v269 = vsub.f32 %v267, %v268
    %v270 = vand.u32 %v269, 4294901760
    %271 = vmatpush1.msra.mxu0 %v270
    %272 = vmatprep.subr.mxu0 0.0
    %273 = vmatpush1.msra.mxu0 0.0
    %274 = vmatprep.subr.mxu0 0.0
    %275 = vmatpush1.msra.mxu0 0.0
    %276 = vmatprep.subr.mxu0 0.0
    %277 = vmatpush1.msra.mxu0 0.0
    %278 = vmatprep.subr.mxu0 0.0
    %279 = vmatpush1.msra.mxu0 0.0
    %280 = vmatprep.subr.mxu0 0.0
    %281 = vmatpush1.msra.mxu0 0.0
    %282 = vmatprep.subr.mxu0 0.0
    %283 = vmatpush1.msra.mxu0 0.0
    %284 = vmatprep.subr.mxu0 0.0
    %285 = vmatpush1.msra.mxu0 0.0
    %286 = vmatprep.subr.mxu0 0.0
    %287 = vmatpush1.msra.mxu0 0.0
    %288 = vmatprep.subr.mxu0 0.0
    %289 = vmatpush1.msra.mxu0 0.0
    %290 = vmatprep.subr.mxu0 0.0
    %291 = vmatpush1.msra.mxu0 0.0
    %292 = vmatprep.subr.mxu0 0.0
    %293 = vmatpush1.msra.mxu0 0.0
    %294 = vmatprep.subr.mxu0 0.0
    %295 = vmatpush1.msra.mxu0 0.0
    %296 = vmatprep.subr.mxu0 0.0
    %297 = vmatpush1.msra.mxu0 0.0
    %298 = vmatprep.subr.mxu0 0.0
    %299 = vmatpush1.msra.mxu0 0.0
    %300 = vmatprep.subr.mxu0 0.0
    %301 = vmatpush1.msra.mxu0 0.0
    %302 = vmatprep.subr.mxu0 0.0
    %303 = vmatpush1.msra.mxu0 0.0
    %304 = vmatprep.subr.mxu0 0.0
    %305 = vmatpush1.msra.mxu0 0.0
    %306 = vmatprep.subr.mxu0 0.0
    %307 = vmatpush1.msra.mxu0 0.0
    %308 = vmatprep.subr.mxu0 0.0
    %309 = vmatpush1.msra.mxu0 0.0
    %310 = vmatprep.subr.mxu0 0.0
    %311 = vmatpush1.msra.mxu0 0.0
    %312 = vmatprep.subr.mxu0 0.0
    %313 = vmatpush1.msra.mxu0 0.0
    %314 = vmatprep.subr.mxu0 0.0
    %315 = vmatpush1.msra.mxu0 0.0
    %316 = vmatprep.subr.mxu0 0.0
    %317 = vmatpush1.msra.mxu0 0.0
    %318 = vmatprep.subr.mxu0 0.0
    %319 = vmatpush1.msra.mxu0 0.0
    %320 = vmatprep.subr.mxu0 0.0
    %321 = vmatpush1.msra.mxu0 0.0
    %322 = vmatprep.subr.mxu0 0.0
    %323 = vmatpush1.msra.mxu0 0.0
    %324 = vmatprep.subr.mxu0 0.0
    %325 = vmatpush1.msra.mxu0 0.0
    %326 = vmatprep.subr.mxu0 0.0
    %327 = vmatpush1.msra.mxu0 0.0
    %328 = vmatprep.mubr.f32.mxu0 0.0
    %v329 = vand.u32 %v163, 4294901760
    %330 = vmatmul.mubr.f32.gmra.mrb[0].mxu0 %v329
    %v331 = vpop.f32.mrb[0].mxu0
    %v332 = vadd.f32 %v241, %v331
    %v333 = vpop.f32.mrb[0].mxu0
    %334 = vdwg.mxu0
    %335 = vmatprep.subr.mxu0 0.0
    %v336 = vand.u32 %v101, 4294901760
    %v337 = vsub.f32 %v101, %v336
    %338 = vmatpush1.msra.mxu0 %v337
    %339 = vmatprep.subr.mxu0 0.0
    %v340 = vand.u32 %v102, 4294901760
    %v341 = vsub.f32 %v102, %v340
    %342 = vmatpush1.msra.mxu0 %v341
    %343 = vmatprep.subr.mxu0 0.0
    %v344 = vand.u32 %v103, 4294901760
    %v345 = vsub.f32 %v103, %v344
    %346 = vmatpush1.msra.mxu0 %v345
    %347 = vmatprep.subr.mxu0 0.0
    %v348 = vand.u32 %v104, 4294901760
    %v349 = vsub.f32 %v104, %v348
    %350 = vmatpush1.msra.mxu0 %v349
    %351 = vmatprep.subr.mxu0 0.0
    %352 = vmatpush1.msra.mxu0 0.0
    %353 = vmatprep.subr.mxu0 0.0
    %354 = vmatpush1.msra.mxu0 0.0
    %355 = vmatprep.subr.mxu0 0.0
    %356 = vmatpush1.msra.mxu0 0.0
    %357 = vmatprep.subr.mxu0 0.0
    %358 = vmatpush1.msra.mxu0 0.0
    %359 = vmatprep.subr.mxu0 0.0
    %360 = vmatpush1.msra.mxu0 0.0
    %361 = vmatprep.subr.mxu0 0.0
    %362 = vmatpush1.msra.mxu0 0.0
    %363 = vmatprep.subr.mxu0 0.0
    %364 = vmatpush1.msra.mxu0 0.0
    %365 = vmatprep.subr.mxu0 0.0
    %366 = vmatpush1.msra.mxu0 0.0
    %367 = vmatprep.subr.mxu0 0.0
    %368 = vmatpush1.msra.mxu0 0.0
    %369 = vmatprep.subr.mxu0 0.0
    %370 = vmatpush1.msra.mxu0 0.0
    %371 = vmatprep.subr.mxu0 0.0
    %372 = vmatpush1.msra.mxu0 0.0
    %373 = vmatprep.subr.mxu0 0.0
    %374 = vmatpush1.msra.mxu0 0.0
    %375 = vmatprep.subr.mxu0 0.0
    %376 = vmatpush1.msra.mxu0 0.0
    %377 = vmatprep.subr.mxu0 0.0
    %378 = vmatpush1.msra.mxu0 0.0
    %379 = vmatprep.subr.mxu0 0.0
    %380 = vmatpush1.msra.mxu0 0.0
    %381 = vmatprep.subr.mxu0 0.0
    %382 = vmatpush1.msra.mxu0 0.0
    %383 = vmatprep.subr.mxu0 0.0
    %384 = vmatpush1.msra.mxu0 0.0
    %385 = vmatprep.subr.mxu0 0.0
    %386 = vmatpush1.msra.mxu0 0.0
    %387 = vmatprep.subr.mxu0 0.0
    %388 = vmatpush1.msra.mxu0 0.0
    %389 = vmatprep.subr.mxu0 0.0
    %390 = vmatpush1.msra.mxu0 0.0
    %391 = vmatprep.subr.mxu0 0.0
    %392 = vmatpush1.msra.mxu0 0.0
    %393 = vmatprep.subr.mxu0 0.0
    %394 = vmatpush1.msra.mxu0 0.0
    %395 = vmatprep.subr.mxu0 0.0
    %396 = vmatpush1.msra.mxu0 0.0
    %397 = vmatprep.subr.mxu0 0.0
    %398 = vmatpush1.msra.mxu0 0.0
    %399 = vmatprep.subr.mxu0 0.0
    %400 = vmatpush1.msra.mxu0 0.0
    %401 = vmatprep.subr.mxu0 0.0
    %402 = vmatpush1.msra.mxu0 0.0
    %403 = vmatprep.subr.mxu0 0.0
    %404 = vmatpush1.msra.mxu0 0.0
    %405 = vmatprep.subr.mxu0 0.0
    %406 = vmatpush1.msra.mxu0 0.0
    %407 = vmatprep.mubr.f32.mxu0 0.0
    %v408 = vand.u32 %v163, 4294901760
    %v409 = vsub.f32 %v163, %v408
    %410 = vmatmul.mubr.f32.gmra.mrb[0].mxu0 %v409
    %v411 = vpop.f32.mrb[0].mxu0
    %v412 = vadd.f32 %v332, %v411
    %v413 = vpop.f32.mrb[0].mxu0
    %414 = vdwg.mxu0
    %415 = vmatprep.subr.mxu0 0.0
    %v416 = vand.u32 %v101, 4294901760
    %417 = vmatpush1.msra.mxu0 %v416
    %418 = vmatprep.subr.mxu0 0.0
    %v419 = vand.u32 %v102, 4294901760
    %420 = vmatpush1.msra.mxu0 %v419
    %421 = vmatprep.subr.mxu0 0.0
    %v422 = vand.u32 %v103, 4294901760
    %423 = vmatpush1.msra.mxu0 %v422
    %424 = vmatprep.subr.mxu0 0.0
    %v425 = vand.u32 %v104, 4294901760
    %426 = vmatpush1.msra.mxu0 %v425
    %427 = vmatprep.subr.mxu0 0.0
    %428 = vmatpush1.msra.mxu0 0.0
    %429 = vmatprep.subr.mxu0 0.0
    %430 = vmatpush1.msra.mxu0 0.0
    %431 = vmatprep.subr.mxu0 0.0
    %432 = vmatpush1.msra.mxu0 0.0
    %433 = vmatprep.subr.mxu0 0.0
    %434 = vmatpush1.msra.mxu0 0.0
    %435 = vmatprep.subr.mxu0 0.0
    %436 = vmatpush1.msra.mxu0 0.0
    %437 = vmatprep.subr.mxu0 0.0
    %438 = vmatpush1.msra.mxu0 0.0
    %439 = vmatprep.subr.mxu0 0.0
    %440 = vmatpush1.msra.mxu0 0.0
    %441 = vmatprep.subr.mxu0 0.0
    %442 = vmatpush1.msra.mxu0 0.0
    %443 = vmatprep.subr.mxu0 0.0
    %444 = vmatpush1.msra.mxu0 0.0
    %445 = vmatprep.subr.mxu0 0.0
    %446 = vmatpush1.msra.mxu0 0.0
    %447 = vmatprep.subr.mxu0 0.0
    %448 = vmatpush1.msra.mxu0 0.0
    %449 = vmatprep.subr.mxu0 0.0
    %450 = vmatpush1.msra.mxu0 0.0
    %451 = vmatprep.subr.mxu0 0.0
    %452 = vmatpush1.msra.mxu0 0.0
    %453 = vmatprep.subr.mxu0 0.0
    %454 = vmatpush1.msra.mxu0 0.0
    %455 = vmatprep.subr.mxu0 0.0
    %456 = vmatpush1.msra.mxu0 0.0
    %457 = vmatprep.subr.mxu0 0.0
    %458 = vmatpush1.msra.mxu0 0.0
    %459 = vmatprep.subr.mxu0 0.0
    %460 = vmatpush1.msra.mxu0 0.0
    %461 = vmatprep.subr.mxu0 0.0
    %462 = vmatpush1.msra.mxu0 0.0
    %463 = vmatprep.subr.mxu0 0.0
    %464 = vmatpush1.msra.mxu0 0.0
    %465 = vmatprep.subr.mxu0 0.0
    %466 = vmatpush1.msra.mxu0 0.0
    %467 = vmatprep.subr.mxu0 0.0
    %468 = vmatpush1.msra.mxu0 0.0
    %469 = vmatprep.subr.mxu0 0.0
    %470 = vmatpush1.msra.mxu0 0.0
    %471 = vmatprep.subr.mxu0 0.0
    %472 = vmatpush1.msra.mxu0 0.0
    %473 = vmatprep.subr.mxu0 0.0
    %474 = vmatpush1.msra.mxu0 0.0
    %475 = vmatprep.subr.mxu0 0.0
    %476 = vmatpush1.msra.mxu0 0.0
    %477 = vmatprep.subr.mxu0 0.0
    %478 = vmatpush1.msra.mxu0 0.0
    %479 = vmatprep.subr.mxu0 0.0
    %480 = vmatpush1.msra.mxu0 0.0
    %481 = vmatprep.subr.mxu0 0.0
    %482 = vmatpush1.msra.mxu0 0.0
    %483 = vmatprep.mubr.f32.mxu0 0.0
    %v484 = vand.u32 %v163, 4294901760
    %v485 = vsub.f32 %v163, %v484
    %v486 = vand.u32 %v485, 4294901760
    %487 = vmatmul.mubr.f32.gmra.mrb[0].mxu0 %v486
    %v488 = vpop.f32.mrb[0].mxu0
    %v489 = vadd.f32 %v412, %v488
    %v490 = vpop.f32.mrb[0].mxu0
    %491 = vdwg.mxu0
    %492 = vmatprep.subr.mxu0 0.0
    %v493 = vand.u32 %v101, 4294901760
    %v494 = vsub.f32 %v101, %v493
    %v495 = vand.u32 %v494, 4294901760
    %496 = vmatpush1.msra.mxu0 %v495
    %497 = vmatprep.subr.mxu0 0.0
    %v498 = vand.u32 %v102, 4294901760
    %v499 = vsub.f32 %v102, %v498
    %v500 = vand.u32 %v499, 4294901760
    %501 = vmatpush1.msra.mxu0 %v500
    %502 = vmatprep.subr.mxu0 0.0
    %v503 = vand.u32 %v103, 4294901760
    %v504 = vsub.f32 %v103, %v503
    %v505 = vand.u32 %v504, 4294901760
    %506 = vmatpush1.msra.mxu0 %v505
    %507 = vmatprep.subr.mxu0 0.0
    %v508 = vand.u32 %v104, 4294901760
    %v509 = vsub.f32 %v104, %v508
    %v510 = vand.u32 %v509, 4294901760
    %511 = vmatpush1.msra.mxu0 %v510
    %512 = vmatprep.subr.mxu0 0.0
    %513 = vmatpush1.msra.mxu0 0.0
    %514 = vmatprep.subr.mxu0 0.0
    %515 = vmatpush1.msra.mxu0 0.0
    %516 = vmatprep.subr.mxu0 0.0
    %517 = vmatpush1.msra.mxu0 0.0
    %518 = vmatprep.subr.mxu0 0.0
    %519 = vmatpush1.msra.mxu0 0.0
    %520 = vmatprep.subr.mxu0 0.0
    %521 = vmatpush1.msra.mxu0 0.0
    %522 = vmatprep.subr.mxu0 0.0
    %523 = vmatpush1.msra.mxu0 0.0
    %524 = vmatprep.subr.mxu0 0.0
    %525 = vmatpush1.msra.mxu0 0.0
    %526 = vmatprep.subr.mxu0 0.0
    %527 = vmatpush1.msra.mxu0 0.0
    %528 = vmatprep.subr.mxu0 0.0
    %529 = vmatpush1.msra.mxu0 0.0
    %530 = vmatprep.subr.mxu0 0.0
    %531 = vmatpush1.msra.mxu0 0.0
    %532 = vmatprep.subr.mxu0 0.0
    %533 = vmatpush1.msra.mxu0 0.0
    %534 = vmatprep.subr.mxu0 0.0
    %535 = vmatpush1.msra.mxu0 0.0
    %536 = vmatprep.subr.mxu0 0.0
    %537 = vmatpush1.msra.mxu0 0.0
    %538 = vmatprep.subr.mxu0 0.0
    %539 = vmatpush1.msra.mxu0 0.0
    %540 = vmatprep.subr.mxu0 0.0
    %541 = vmatpush1.msra.mxu0 0.0
    %542 = vmatprep.subr.mxu0 0.0
    %543 = vmatpush1.msra.mxu0 0.0
    %544 = vmatprep.subr.mxu0 0.0
    %545 = vmatpush1.msra.mxu0 0.0
    %546 = vmatprep.subr.mxu0 0.0
    %547 = vmatpush1.msra.mxu0 0.0
    %548 = vmatprep.subr.mxu0 0.0
    %549 = vmatpush1.msra.mxu0 0.0
    %550 = vmatprep.subr.mxu0 0.0
    %551 = vmatpush1.msra.mxu0 0.0
    %552 = vmatprep.subr.mxu0 0.0
    %553 = vmatpush1.msra.mxu0 0.0
    %554 = vmatprep.subr.mxu0 0.0
    %555 = vmatpush1.msra.mxu0 0.0
    %556 = vmatprep.subr.mxu0 0.0
    %557 = vmatpush1.msra.mxu0 0.0
    %558 = vmatprep.subr.mxu0 0.0
    %559 = vmatpush1.msra.mxu0 0.0
    %560 = vmatprep.subr.mxu0 0.0
    %561 = vmatpush1.msra.mxu0 0.0
    %562 = vmatprep.subr.mxu0 0.0
    %563 = vmatpush1.msra.mxu0 0.0
    %564 = vmatprep.subr.mxu0 0.0
    %565 = vmatpush1.msra.mxu0 0.0
    %566 = vmatprep.subr.mxu0 0.0
    %567 = vmatpush1.msra.mxu0 0.0
    %568 = vmatprep.mubr.f32.mxu0 0.0
    %v569 = vand.u32 %v163, 4294901760
    %570 = vmatmul.mubr.f32.gmra.mrb[0].mxu0 %v569
    %v571 = vpop.f32.mrb[0].mxu0
    %v572 = vadd.f32 %v489, %v571
    %v573 = vpop.f32.mrb[0].mxu0
    %574 = vdwg.mxu0
    %575 = vmatprep.subr.mxu0 0.0
    %v576 = vand.u32 %v101, 4294901760
    %577 = vmatpush1.msra.mxu0 %v576
    %578 = vmatprep.subr.mxu0 0.0
    %v579 = vand.u32 %v102, 4294901760
    %580 = vmatpush1.msra.mxu0 %v579
    %581 = vmatprep.subr.mxu0 0.0
    %v582 = vand.u32 %v103, 4294901760
    %583 = vmatpush1.msra.mxu0 %v582
    %584 = vmatprep.subr.mxu0 0.0
    %v585 = vand.u32 %v104, 4294901760
    %586 = vmatpush1.msra.mxu0 %v585
    %587 = vmatprep.subr.mxu0 0.0
    %588 = vmatpush1.msra.mxu0 0.0
    %589 = vmatprep.subr.mxu0 0.0
    %590 = vmatpush1.msra.mxu0 0.0
    %591 = vmatprep.subr.mxu0 0.0
    %592 = vmatpush1.msra.mxu0 0.0
    %593 = vmatprep.subr.mxu0 0.0
    %594 = vmatpush1.msra.mxu0 0.0
    %595 = vmatprep.subr.mxu0 0.0
    %596 = vmatpush1.msra.mxu0 0.0
    %597 = vmatprep.subr.mxu0 0.0
    %598 = vmatpush1.msra.mxu0 0.0
    %599 = vmatprep.subr.mxu0 0.0
    %600 = vmatpush1.msra.mxu0 0.0
    %601 = vmatprep.subr.mxu0 0.0
    %602 = vmatpush1.msra.mxu0 0.0
    %603 = vmatprep.subr.mxu0 0.0
    %604 = vmatpush1.msra.mxu0 0.0
    %605 = vmatprep.subr.mxu0 0.0
    %606 = vmatpush1.msra.mxu0 0.0
    %607 = vmatprep.subr.mxu0 0.0
    %608 = vmatpush1.msra.mxu0 0.0
    %609 = vmatprep.subr.mxu0 0.0
    %610 = vmatpush1.msra.mxu0 0.0
    %611 = vmatprep.subr.mxu0 0.0
    %612 = vmatpush1.msra.mxu0 0.0
    %613 = vmatprep.subr.mxu0 0.0
    %614 = vmatpush1.msra.mxu0 0.0
    %615 = vmatprep.subr.mxu0 0.0
    %616 = vmatpush1.msra.mxu0 0.0
    %617 = vmatprep.subr.mxu0 0.0
    %618 = vmatpush1.msra.mxu0 0.0
    %619 = vmatprep.subr.mxu0 0.0
    %620 = vmatpush1.msra.mxu0 0.0
    %621 = vmatprep.subr.mxu0 0.0
    %622 = vmatpush1.msra.mxu0 0.0
    %623 = vmatprep.subr.mxu0 0.0
    %624 = vmatpush1.msra.mxu0 0.0
    %625 = vmatprep.subr.mxu0 0.0
    %626 = vmatpush1.msra.mxu0 0.0
    %627 = vmatprep.subr.mxu0 0.0
    %628 = vmatpush1.msra.mxu0 0.0
    %629 = vmatprep.subr.mxu0 0.0
    %630 = vmatpush1.msra.mxu0 0.0
    %631 = vmatprep.subr.mxu0 0.0
    %632 = vmatpush1.msra.mxu0 0.0
    %633 = vmatprep.subr.mxu0 0.0
    %634 = vmatpush1.msra.mxu0 0.0
    %635 = vmatprep.subr.mxu0 0.0
    %636 = vmatpush1.msra.mxu0 0.0
    %637 = vmatprep.subr.mxu0 0.0
    %638 = vmatpush1.msra.mxu0 0.0
    %639 = vmatprep.subr.mxu0 0.0
    %640 = vmatpush1.msra.mxu0 0.0
    %641 = vmatprep.subr.mxu0 0.0
    %642 = vmatpush1.msra.mxu0 0.0
    %643 = vmatprep.mubr.f32.mxu0 0.0
    %v644 = vand.u32 %v163, 4294901760
    %645 = vmatmul.mubr.f32.gmra.mrb[0].mxu0 %v644
    %v646 = vpop.f32.mrb[0].mxu0
    %v647 = vadd.f32 %v572, %v646
    %v648 = vpop.f32.mrb[0].mxu0
    %649 = vdwg.mxu0
    %v650 = vmax.f32 %v647, 0.0
    %v659 = vlaneseq
    %v660 = vshrl.u32 %v659, 7
    %v661 = vsub.s32 %v115, %v660
    %v662 = vrot.slane %v79, %v661
    %v663 = vlaneseq
    %v664 = vshrl.u32 %v663, 7
    %v665 = vsub.s32 %v120, %v664
    %v666 = vrot.slane %v82, %v665
    %v667 = vsel %vm125, %v666, %v662
    %v668 = vlaneseq
    %v669 = vshrl.u32 %v668, 7
    %v670 = vsub.s32 %v127, %v669
    %v671 = vrot.slane %v85, %v670
    %v672 = vsel %vm132, %v671, %v667
    %v673 = vlaneseq
    %v674 = vshrl.u32 %v673, 7
    %v675 = vsub.s32 %v134, %v674
    %v676 = vrot.slane %v88, %v675
    %v677 = vsel %vm139, %v676, %v672
    %v678 = vlaneseq
    %v679 = vshrl.u32 %v678, 7
    %v680 = vsub.s32 %v115, %v679
    %v681 = vrot.slane %v91, %v680
    %v682 = vlaneseq
    %v683 = vshrl.u32 %v682, 7
    %v684 = vsub.s32 %v120, %v683
    %v685 = vrot.slane %v94, %v684
    %v686 = vsel %vm125, %v685, %v681
    %v687 = vlaneseq
    %v688 = vshrl.u32 %v687, 7
    %v689 = vsub.s32 %v127, %v688
    %v690 = vrot.slane %v97, %v689
    %v691 = vsel %vm132, %v690, %v686
    %v692 = vlaneseq
    %v693 = vshrl.u32 %v692, 7
    %v694 = vsub.s32 %v134, %v693
    %v695 = vrot.slane %v100, %v694
    %v696 = vsel %vm139, %v695, %v691
    %v697 = vsel %vm160, %v696, %v677
    %v698 = vsel %vm162, %v697, 0
    %700 = vmatprep.subr.mxu0 0.0
    %v701 = vand.u32 %v101, 4294901760
    %702 = vmatpush1.msra.mxu0 %v701
    %703 = vmatprep.subr.mxu0 0.0
    %v704 = vand.u32 %v102, 4294901760
    %705 = vmatpush1.msra.mxu0 %v704
    %706 = vmatprep.subr.mxu0 0.0
    %v707 = vand.u32 %v103, 4294901760
    %708 = vmatpush1.msra.mxu0 %v707
    %709 = vmatprep.subr.mxu0 0.0
    %v710 = vand.u32 %v104, 4294901760
    %711 = vmatpush1.msra.mxu0 %v710
    %712 = vmatprep.subr.mxu0 0.0
    %713 = vmatpush1.msra.mxu0 0.0
    %714 = vmatprep.subr.mxu0 0.0
    %715 = vmatpush1.msra.mxu0 0.0
    %716 = vmatprep.subr.mxu0 0.0
    %717 = vmatpush1.msra.mxu0 0.0
    %718 = vmatprep.subr.mxu0 0.0
    %719 = vmatpush1.msra.mxu0 0.0
    %720 = vmatprep.subr.mxu0 0.0
    %721 = vmatpush1.msra.mxu0 0.0
    %722 = vmatprep.subr.mxu0 0.0
    %723 = vmatpush1.msra.mxu0 0.0
    %724 = vmatprep.subr.mxu0 0.0
    %725 = vmatpush1.msra.mxu0 0.0
    %726 = vmatprep.subr.mxu0 0.0
    %727 = vmatpush1.msra.mxu0 0.0
    %728 = vmatprep.subr.mxu0 0.0
    %729 = vmatpush1.msra.mxu0 0.0
    %730 = vmatprep.subr.mxu0 0.0
    %731 = vmatpush1.msra.mxu0 0.0
    %732 = vmatprep.subr.mxu0 0.0
    %733 = vmatpush1.msra.mxu0 0.0
    %734 = vmatprep.subr.mxu0 0.0
    %735 = vmatpush1.msra.mxu0 0.0
    %736 = vmatprep.subr.mxu0 0.0
    %737 = vmatpush1.msra.mxu0 0.0
    %738 = vmatprep.subr.mxu0 0.0
    %739 = vmatpush1.msra.mxu0 0.0
    %740 = vmatprep.subr.mxu0 0.0
    %741 = vmatpush1.msra.mxu0 0.0
    %742 = vmatprep.subr.mxu0 0.0
    %743 = vmatpush1.msra.mxu0 0.0
    %744 = vmatprep.subr.mxu0 0.0
    %745 = vmatpush1.msra.mxu0 0.0
    %746 = vmatprep.subr.mxu0 0.0
    %747 = vmatpush1.msra.mxu0 0.0
    %748 = vmatprep.subr.mxu0 0.0
    %749 = vmatpush1.msra.mxu0 0.0
    %750 = vmatprep.subr.mxu0 0.0
    %751 = vmatpush1.msra.mxu0 0.0
    %752 = vmatprep.subr.mxu0 0.0
    %753 = vmatpush1.msra.mxu0 0.0
    %754 = vmatprep.subr.mxu0 0.0
    %755 = vmatpush1.msra.mxu0 0.0
    %756 = vmatprep.subr.mxu0 0.0
    %757 = vmatpush1.msra.mxu0 0.0
    %758 = vmatprep.subr.mxu0 0.0
    %759 = vmatpush1.msra.mxu0 0.0
    %760 = vmatprep.subr.mxu0 0.0
    %761 = vmatpush1.msra.mxu0 0.0
    %762 = vmatprep.subr.mxu0 0.0
    %763 = vmatpush1.msra.mxu0 0.0
    %764 = vmatprep.subr.mxu0 0.0
    %765 = vmatpush1.msra.mxu0 0.0
    %766 = vmatprep.subr.mxu0 0.0
    %767 = vmatpush1.msra.mxu0 0.0
    %768 = vmatprep.mubr.f32.mxu0 0.0
    %v769 = vand.u32 %v698, 4294901760
    %v770 = vsub.f32 %v698, %v769
    %v771 = vand.u32 %v770, 4294901760
    %v772 = vsub.f32 %v770, %v771
    %v773 = vand.u32 %v772, 4294901760
    %774 = vmatmul.mubr.f32.gmra.mrb[0].mxu0 %v773
    %v775 = vpop.f32.mrb[0].mxu0
    %v776 = vadd.f32 0.0, %v775
    %v777 = vpop.f32.mrb[0].mxu0
    %778 = vdwg.mxu0
    %779 = vmatprep.subr.mxu0 0.0
    %v780 = vand.u32 %v101, 4294901760
    %v781 = vsub.f32 %v101, %v780
    %v782 = vand.u32 %v781, 4294901760
    %v783 = vsub.f32 %v781, %v782
    %v784 = vand.u32 %v783, 4294901760
    %785 = vmatpush1.msra.mxu0 %v784
    %786 = vmatprep.subr.mxu0 0.0
    %v787 = vand.u32 %v102, 4294901760
    %v788 = vsub.f32 %v102, %v787
    %v789 = vand.u32 %v788, 4294901760
    %v790 = vsub.f32 %v788, %v789
    %v791 = vand.u32 %v790, 4294901760
    %792 = vmatpush1.msra.mxu0 %v791
    %793 = vmatprep.subr.mxu0 0.0
    %v794 = vand.u32 %v103, 4294901760
    %v795 = vsub.f32 %v103, %v794
    %v796 = vand.u32 %v795, 4294901760
    %v797 = vsub.f32 %v795, %v796
    %v798 = vand.u32 %v797, 4294901760
    %799 = vmatpush1.msra.mxu0 %v798
    %800 = vmatprep.subr.mxu0 0.0
    %v801 = vand.u32 %v104, 4294901760
    %v802 = vsub.f32 %v104, %v801
    %v803 = vand.u32 %v802, 4294901760
    %v804 = vsub.f32 %v802, %v803
    %v805 = vand.u32 %v804, 4294901760
    %806 = vmatpush1.msra.mxu0 %v805
    %807 = vmatprep.subr.mxu0 0.0
    %808 = vmatpush1.msra.mxu0 0.0
    %809 = vmatprep.subr.mxu0 0.0
    %810 = vmatpush1.msra.mxu0 0.0
    %811 = vmatprep.subr.mxu0 0.0
    %812 = vmatpush1.msra.mxu0 0.0
    %813 = vmatprep.subr.mxu0 0.0
    %814 = vmatpush1.msra.mxu0 0.0
    %815 = vmatprep.subr.mxu0 0.0
    %816 = vmatpush1.msra.mxu0 0.0
    %817 = vmatprep.subr.mxu0 0.0
    %818 = vmatpush1.msra.mxu0 0.0
    %819 = vmatprep.subr.mxu0 0.0
    %820 = vmatpush1.msra.mxu0 0.0
    %821 = vmatprep.subr.mxu0 0.0
    %822 = vmatpush1.msra.mxu0 0.0
    %823 = vmatprep.subr.mxu0 0.0
    %824 = vmatpush1.msra.mxu0 0.0
    %825 = vmatprep.subr.mxu0 0.0
    %826 = vmatpush1.msra.mxu0 0.0
    %827 = vmatprep.subr.mxu0 0.0
    %828 = vmatpush1.msra.mxu0 0.0
    %829 = vmatprep.subr.mxu0 0.0
    %830 = vmatpush1.msra.mxu0 0.0
    %831 = vmatprep.subr.mxu0 0.0
    %832 = vmatpush1.msra.mxu0 0.0
    %833 = vmatprep.subr.mxu0 0.0
    %834 = vmatpush1.msra.mxu0 0.0
    %835 = vmatprep.subr.mxu0 0.0
    %836 = vmatpush1.msra.mxu0 0.0
    %837 = vmatprep.subr.mxu0 0.0
    %838 = vmatpush1.msra.mxu0 0.0
    %839 = vmatprep.subr.mxu0 0.0
    %840 = vmatpush1.msra.mxu0 0.0
    %841 = vmatprep.subr.mxu0 0.0
    %842 = vmatpush1.msra.mxu0 0.0
    %843 = vmatprep.subr.mxu0 0.0
    %844 = vmatpush1.msra.mxu0 0.0
    %845 = vmatprep.subr.mxu0 0.0
    %846 = vmatpush1.msra.mxu0 0.0
    %847 = vmatprep.subr.mxu0 0.0
    %848 = vmatpush1.msra.mxu0 0.0
    %849 = vmatprep.subr.mxu0 0.0
    %850 = vmatpush1.msra.mxu0 0.0
    %851 = vmatprep.subr.mxu0 0.0
    %852 = vmatpush1.msra.mxu0 0.0
    %853 = vmatprep.subr.mxu0 0.0
    %854 = vmatpush1.msra.mxu0 0.0
    %855 = vmatprep.subr.mxu0 0.0
    %856 = vmatpush1.msra.mxu0 0.0
    %857 = vmatprep.subr.mxu0 0.0
    %858 = vmatpush1.msra.mxu0 0.0
    %859 = vmatprep.subr.mxu0 0.0
    %860 = vmatpush1.msra.mxu0 0.0
    %861 = vmatprep.subr.mxu0 0.0
    %862 = vmatpush1.msra.mxu0 0.0
    %863 = vmatprep.mubr.f32.mxu0 0.0
    %v864 = vand.u32 %v698, 4294901760
    %865 = vmatmul.mubr.f32.gmra.mrb[0].mxu0 %v864
    %v866 = vpop.f32.mrb[0].mxu0
    %v867 = vadd.f32 %v776, %v866
    %v868 = vpop.f32.mrb[0].mxu0
    %869 = vdwg.mxu0
    %870 = vmatprep.subr.mxu0 0.0
    %v871 = vand.u32 %v101, 4294901760
    %v872 = vsub.f32 %v101, %v871
    %873 = vmatpush1.msra.mxu0 %v872
    %874 = vmatprep.subr.mxu0 0.0
    %v875 = vand.u32 %v102, 4294901760
    %v876 = vsub.f32 %v102, %v875
    %877 = vmatpush1.msra.mxu0 %v876
    %878 = vmatprep.subr.mxu0 0.0
    %v879 = vand.u32 %v103, 4294901760
    %v880 = vsub.f32 %v103, %v879
    %881 = vmatpush1.msra.mxu0 %v880
    %882 = vmatprep.subr.mxu0 0.0
    %v883 = vand.u32 %v104, 4294901760
    %v884 = vsub.f32 %v104, %v883
    %885 = vmatpush1.msra.mxu0 %v884
    %886 = vmatprep.subr.mxu0 0.0
    %887 = vmatpush1.msra.mxu0 0.0
    %888 = vmatprep.subr.mxu0 0.0
    %889 = vmatpush1.msra.mxu0 0.0
    %890 = vmatprep.subr.mxu0 0.0
    %891 = vmatpush1.msra.mxu0 0.0
    %892 = vmatprep.subr.mxu0 0.0
    %893 = vmatpush1.msra.mxu0 0.0
    %894 = vmatprep.subr.mxu0 0.0
    %895 = vmatpush1.msra.mxu0 0.0
    %896 = vmatprep.subr.mxu0 0.0
    %897 = vmatpush1.msra.mxu0 0.0
    %898 = vmatprep.subr.mxu0 0.0
    %899 = vmatpush1.msra.mxu0 0.0
    %900 = vmatprep.subr.mxu0 0.0
    %901 = vmatpush1.msra.mxu0 0.0
    %902 = vmatprep.subr.mxu0 0.0
    %903 = vmatpush1.msra.mxu0 0.0
    %904 = vmatprep.subr.mxu0 0.0
    %905 = vmatpush1.msra.mxu0 0.0
    %906 = vmatprep.subr.mxu0 0.0
    %907 = vmatpush1.msra.mxu0 0.0
    %908 = vmatprep.subr.mxu0 0.0
    %909 = vmatpush1.msra.mxu0 0.0
    %910 = vmatprep.subr.mxu0 0.0
    %911 = vmatpush1.msra.mxu0 0.0
    %912 = vmatprep.subr.mxu0 0.0
    %913 = vmatpush1.msra.mxu0 0.0
    %914 = vmatprep.subr.mxu0 0.0
    %915 = vmatpush1.msra.mxu0 0.0
    %916 = vmatprep.subr.mxu0 0.0
    %917 = vmatpush1.msra.mxu0 0.0
    %918 = vmatprep.subr.mxu0 0.0
    %919 = vmatpush1.msra.mxu0 0.0
    %920 = vmatprep.subr.mxu0 0.0
    %921 = vmatpush1.msra.mxu0 0.0
    %922 = vmatprep.subr.mxu0 0.0
    %923 = vmatpush1.msra.mxu0 0.0
    %924 = vmatprep.subr.mxu0 0.0
    %925 = vmatpush1.msra.mxu0 0.0
    %926 = vmatprep.subr.mxu0 0.0
    %927 = vmatpush1.msra.mxu0 0.0
    %928 = vmatprep.subr.mxu0 0.0
    %929 = vmatpush1.msra.mxu0 0.0
    %930 = vmatprep.subr.mxu0 0.0
    %931 = vmatpush1.msra.mxu0 0.0
    %932 = vmatprep.subr.mxu0 0.0
    %933 = vmatpush1.msra.mxu0 0.0
    %934 = vmatprep.subr.mxu0 0.0
    %935 = vmatpush1.msra.mxu0 0.0
    %936 = vmatprep.subr.mxu0 0.0
    %937 = vmatpush1.msra.mxu0 0.0
    %938 = vmatprep.subr.mxu0 0.0
    %939 = vmatpush1.msra.mxu0 0.0
    %940 = vmatprep.subr.mxu0 0.0
    %941 = vmatpush1.msra.mxu0 0.0
    %942 = vmatprep.mubr.f32.mxu0 0.0
    %v943 = vand.u32 %v698, 4294901760
    %v944 = vsub.f32 %v698, %v943
    %945 = vmatmul.mubr.f32.gmra.mrb[0].mxu0 %v944
    %v946 = vpop.f32.mrb[0].mxu0
    %v947 = vadd.f32 %v867, %v946
    %v948 = vpop.f32.mrb[0].mxu0
    %949 = vdwg.mxu0
    %950 = vmatprep.subr.mxu0 0.0
    %v951 = vand.u32 %v101, 4294901760
    %952 = vmatpush1.msra.mxu0 %v951
    %953 = vmatprep.subr.mxu0 0.0
    %v954 = vand.u32 %v102, 4294901760
    %955 = vmatpush1.msra.mxu0 %v954
    %956 = vmatprep.subr.mxu0 0.0
    %v957 = vand.u32 %v103, 4294901760
    %958 = vmatpush1.msra.mxu0 %v957
    %959 = vmatprep.subr.mxu0 0.0
    %v960 = vand.u32 %v104, 4294901760
    %961 = vmatpush1.msra.mxu0 %v960
    %962 = vmatprep.subr.mxu0 0.0
    %963 = vmatpush1.msra.mxu0 0.0
    %964 = vmatprep.subr.mxu0 0.0
    %965 = vmatpush1.msra.mxu0 0.0
    %966 = vmatprep.subr.mxu0 0.0
    %967 = vmatpush1.msra.mxu0 0.0
    %968 = vmatprep.subr.mxu0 0.0
    %969 = vmatpush1.msra.mxu0 0.0
    %970 = vmatprep.subr.mxu0 0.0
    %971 = vmatpush1.msra.mxu0 0.0
    %972 = vmatprep.subr.mxu0 0.0
    %973 = vmatpush1.msra.mxu0 0.0
    %974 = vmatprep.subr.mxu0 0.0
    %975 = vmatpush1.msra.mxu0 0.0
    %976 = vmatprep.subr.mxu0 0.0
    %977 = vmatpush1.msra.mxu0 0.0
    %978 = vmatprep.subr.mxu0 0.0
    %979 = vmatpush1.msra.mxu0 0.0
    %980 = vmatprep.subr.mxu0 0.0
    %981 = vmatpush1.msra.mxu0 0.0
    %982 = vmatprep.subr.mxu0 0.0
    %983 = vmatpush1.msra.mxu0 0.0
    %984 = vmatprep.subr.mxu0 0.0
    %985 = vmatpush1.msra.mxu0 0.0
    %986 = vmatprep.subr.mxu0 0.0
    %987 = vmatpush1.msra.mxu0 0.0
    %988 = vmatprep.subr.mxu0 0.0
    %989 = vmatpush1.msra.mxu0 0.0
    %990 = vmatprep.subr.mxu0 0.0
    %991 = vmatpush1.msra.mxu0 0.0
    %992 = vmatprep.subr.mxu0 0.0
    %993 = vmatpush1.msra.mxu0 0.0
    %994 = vmatprep.subr.mxu0 0.0
    %995 = vmatpush1.msra.mxu0 0.0
    %996 = vmatprep.subr.mxu0 0.0
    %997 = vmatpush1.msra.mxu0 0.0
    %998 = vmatprep.subr.mxu0 0.0
    %999 = vmatpush1.msra.mxu0 0.0
    %1000 = vmatprep.subr.mxu0 0.0
    %1001 = vmatpush1.msra.mxu0 0.0
    %1002 = vmatprep.subr.mxu0 0.0
    %1003 = vmatpush1.msra.mxu0 0.0
    %1004 = vmatprep.subr.mxu0 0.0
    %1005 = vmatpush1.msra.mxu0 0.0
    %1006 = vmatprep.subr.mxu0 0.0
    %1007 = vmatpush1.msra.mxu0 0.0
    %1008 = vmatprep.subr.mxu0 0.0
    %1009 = vmatpush1.msra.mxu0 0.0
    %1010 = vmatprep.subr.mxu0 0.0
    %1011 = vmatpush1.msra.mxu0 0.0
    %1012 = vmatprep.subr.mxu0 0.0
    %1013 = vmatpush1.msra.mxu0 0.0
    %1014 = vmatprep.subr.mxu0 0.0
    %1015 = vmatpush1.msra.mxu0 0.0
    %1016 = vmatprep.subr.mxu0 0.0
    %1017 = vmatpush1.msra.mxu0 0.0
    %1018 = vmatprep.mubr.f32.mxu0 0.0
    %v1019 = vand.u32 %v698, 4294901760
    %v1020 = vsub.f32 %v698, %v1019
    %v1021 = vand.u32 %v1020, 4294901760
    %1022 = vmatmul.mubr.f32.gmra.mrb[0].mxu0 %v1021
    %v1023 = vpop.f32.mrb[0].mxu0
    %v1024 = vadd.f32 %v947, %v1023
    %v1025 = vpop.f32.mrb[0].mxu0
    %1026 = vdwg.mxu0
    %1027 = vmatprep.subr.mxu0 0.0
    %v1028 = vand.u32 %v101, 4294901760
    %v1029 = vsub.f32 %v101, %v1028
    %v1030 = vand.u32 %v1029, 4294901760
    %1031 = vmatpush1.msra.mxu0 %v1030
    %1032 = vmatprep.subr.mxu0 0.0
    %v1033 = vand.u32 %v102, 4294901760
    %v1034 = vsub.f32 %v102, %v1033
    %v1035 = vand.u32 %v1034, 4294901760
    %1036 = vmatpush1.msra.mxu0 %v1035
    %1037 = vmatprep.subr.mxu0 0.0
    %v1038 = vand.u32 %v103, 4294901760
    %v1039 = vsub.f32 %v103, %v1038
    %v1040 = vand.u32 %v1039, 4294901760
    %1041 = vmatpush1.msra.mxu0 %v1040
    %1042 = vmatprep.subr.mxu0 0.0
    %v1043 = vand.u32 %v104, 4294901760
    %v1044 = vsub.f32 %v104, %v1043
    %v1045 = vand.u32 %v1044, 4294901760
    %1046 = vmatpush1.msra.mxu0 %v1045
    %1047 = vmatprep.subr.mxu0 0.0
    %1048 = vmatpush1.msra.mxu0 0.0
    %1049 = vmatprep.subr.mxu0 0.0
    %1050 = vmatpush1.msra.mxu0 0.0
    %1051 = vmatprep.subr.mxu0 0.0
    %1052 = vmatpush1.msra.mxu0 0.0
    %1053 = vmatprep.subr.mxu0 0.0
    %1054 = vmatpush1.msra.mxu0 0.0
    %1055 = vmatprep.subr.mxu0 0.0
    %1056 = vmatpush1.msra.mxu0 0.0
    %1057 = vmatprep.subr.mxu0 0.0
    %1058 = vmatpush1.msra.mxu0 0.0
    %1059 = vmatprep.subr.mxu0 0.0
    %1060 = vmatpush1.msra.mxu0 0.0
    %1061 = vmatprep.subr.mxu0 0.0
    %1062 = vmatpush1.msra.mxu0 0.0
    %1063 = vmatprep.subr.mxu0 0.0
    %1064 = vmatpush1.msra.mxu0 0.0
    %1065 = vmatprep.subr.mxu0 0.0
    %1066 = vmatpush1.msra.mxu0 0.0
    %1067 = vmatprep.subr.mxu0 0.0
    %1068 = vmatpush1.msra.mxu0 0.0
    %1069 = vmatprep.subr.mxu0 0.0
    %1070 = vmatpush1.msra.mxu0 0.0
    %1071 = vmatprep.subr.mxu0 0.0
    %1072 = vmatpush1.msra.mxu0 0.0
    %1073 = vmatprep.subr.mxu0 0.0
    %1074 = vmatpush1.msra.mxu0 0.0
    %1075 = vmatprep.subr.mxu0 0.0
    %1076 = vmatpush1.msra.mxu0 0.0
    %1077 = vmatprep.subr.mxu0 0.0
    %1078 = vmatpush1.msra.mxu0 0.0
    %1079 = vmatprep.subr.mxu0 0.0
    %1080 = vmatpush1.msra.mxu0 0.0
    %1081 = vmatprep.subr.mxu0 0.0
    %1082 = vmatpush1.msra.mxu0 0.0
    %1083 = vmatprep.subr.mxu0 0.0
    %1084 = vmatpush1.msra.mxu0 0.0
    %1085 = vmatprep.subr.mxu0 0.0
    %1086 = vmatpush1.msra.mxu0 0.0
    %1087 = vmatprep.subr.mxu0 0.0
    %1088 = vmatpush1.msra.mxu0 0.0
    %1089 = vmatprep.subr.mxu0 0.0
    %1090 = vmatpush1.msra.mxu0 0.0
    %1091 = vmatprep.subr.mxu0 0.0
    %1092 = vmatpush1.msra.mxu0 0.0
    %1093 = vmatprep.subr.mxu0 0.0
    %1094 = vmatpush1.msra.mxu0 0.0
    %1095 = vmatprep.subr.mxu0 0.0
    %1096 = vmatpush1.msra.mxu0 0.0
    %1097 = vmatprep.subr.mxu0 0.0
    %1098 = vmatpush1.msra.mxu0 0.0
    %1099 = vmatprep.subr.mxu0 0.0
    %1100 = vmatpush1.msra.mxu0 0.0
    %1101 = vmatprep.subr.mxu0 0.0
    %1102 = vmatpush1.msra.mxu0 0.0
    %1103 = vmatprep.mubr.f32.mxu0 0.0
    %v1104 = vand.u32 %v698, 4294901760
    %1105 = vmatmul.mubr.f32.gmra.mrb[0].mxu0 %v1104
    %v1106 = vpop.f32.mrb[0].mxu0
    %v1107 = vadd.f32 %v1024, %v1106
    %v1108 = vpop.f32.mrb[0].mxu0
    %1109 = vdwg.mxu0
    %1110 = vmatprep.subr.mxu0 0.0
    %v1111 = vand.u32 %v101, 4294901760
    %1112 = vmatpush1.msra.mxu0 %v1111
    %1113 = vmatprep.subr.mxu0 0.0
    %v1114 = vand.u32 %v102, 4294901760
    %1115 = vmatpush1.msra.mxu0 %v1114
    %1116 = vmatprep.subr.mxu0 0.0
    %v1117 = vand.u32 %v103, 4294901760
    %1118 = vmatpush1.msra.mxu0 %v1117
    %1119 = vmatprep.subr.mxu0 0.0
    %v1120 = vand.u32 %v104, 4294901760
    %1121 = vmatpush1.msra.mxu0 %v1120
    %1122 = vmatprep.subr.mxu0 0.0
    %1123 = vmatpush1.msra.mxu0 0.0
    %1124 = vmatprep.subr.mxu0 0.0
    %1125 = vmatpush1.msra.mxu0 0.0
    %1126 = vmatprep.subr.mxu0 0.0
    %1127 = vmatpush1.msra.mxu0 0.0
    %1128 = vmatprep.subr.mxu0 0.0
    %1129 = vmatpush1.msra.mxu0 0.0
    %1130 = vmatprep.subr.mxu0 0.0
    %1131 = vmatpush1.msra.mxu0 0.0
    %1132 = vmatprep.subr.mxu0 0.0
    %1133 = vmatpush1.msra.mxu0 0.0
    %1134 = vmatprep.subr.mxu0 0.0
    %1135 = vmatpush1.msra.mxu0 0.0
    %1136 = vmatprep.subr.mxu0 0.0
    %1137 = vmatpush1.msra.mxu0 0.0
    %1138 = vmatprep.subr.mxu0 0.0
    %1139 = vmatpush1.msra.mxu0 0.0
    %1140 = vmatprep.subr.mxu0 0.0
    %1141 = vmatpush1.msra.mxu0 0.0
    %1142 = vmatprep.subr.mxu0 0.0
    %1143 = vmatpush1.msra.mxu0 0.0
    %1144 = vmatprep.subr.mxu0 0.0
    %1145 = vmatpush1.msra.mxu0 0.0
    %1146 = vmatprep.subr.mxu0 0.0
    %1147 = vmatpush1.msra.mxu0 0.0
    %1148 = vmatprep.subr.mxu0 0.0
    %1149 = vmatpush1.msra.mxu0 0.0
    %1150 = vmatprep.subr.mxu0 0.0
    %1151 = vmatpush1.msra.mxu0 0.0
    %1152 = vmatprep.subr.mxu0 0.0
    %1153 = vmatpush1.msra.mxu0 0.0
    %1154 = vmatprep.subr.mxu0 0.0
    %1155 = vmatpush1.msra.mxu0 0.0
    %1156 = vmatprep.subr.mxu0 0.0
    %1157 = vmatpush1.msra.mxu0 0.0
    %1158 = vmatprep.subr.mxu0 0.0
    %1159 = vmatpush1.msra.mxu0 0.0
    %1160 = vmatprep.subr.mxu0 0.0
    %1161 = vmatpush1.msra.mxu0 0.0
    %1162 = vmatprep.subr.mxu0 0.0
    %1163 = vmatpush1.msra.mxu0 0.0
    %1164 = vmatprep.subr.mxu0 0.0
    %1165 = vmatpush1.msra.mxu0 0.0
    %1166 = vmatprep.subr.mxu0 0.0
    %1167 = vmatpush1.msra.mxu0 0.0
    %1168 = vmatprep.subr.mxu0 0.0
    %1169 = vmatpush1.msra.mxu0 0.0
    %1170 = vmatprep.subr.mxu0 0.0
    %1171 = vmatpush1.msra.mxu0 0.0
    %1172 = vmatprep.subr.mxu0 0.0
    %1173 = vmatpush1.msra.mxu0 0.0
    %1174 = vmatprep.subr.mxu0 0.0
    %1175 = vmatpush1.msra.mxu0 0.0
    %1176 = vmatprep.subr.mxu0 0.0
    %1177 = vmatpush1.msra.mxu0 0.0
    %1178 = vmatprep.mubr.f32.mxu0 0.0
    %v1179 = vand.u32 %v698, 4294901760
    %1180 = vmatmul.mubr.f32.gmra.mrb[0].mxu0 %v1179
    %v1181 = vpop.f32.mrb[0].mxu0
    %v1182 = vadd.f32 %v1107, %v1181
    %v1183 = vpop.f32.mrb[0].mxu0
    %1184 = vdwg.mxu0
    %v1185 = vmax.f32 %v1182, 0.0
    %v1186 = vadd.f32 %v650, %v1185
    %vm1187 = vcmask 15360
    %v1189 = vsel %vm1187, %v1186, 0
    %vm1191 = vcmask 1041408
    %v1193 = vsel %vm1191, %v105, 0
    %1195 = vmatprep.subr.mxu0 0.0
    %v1196 = vand.u32 %v1193, 4294901760
    %1197 = vmatpush1.msra.mxu0 %v1196
    %1198 = vmatprep.subr.mxu0 0.0
    %1199 = vmatpush1.msra.mxu0 0.0
    %1200 = vmatprep.subr.mxu0 0.0
    %1201 = vmatpush1.msra.mxu0 0.0
    %1202 = vmatprep.subr.mxu0 0.0
    %1203 = vmatpush1.msra.mxu0 0.0
    %1204 = vmatprep.subr.mxu0 0.0
    %1205 = vmatpush1.msra.mxu0 0.0
    %1206 = vmatprep.subr.mxu0 0.0
    %1207 = vmatpush1.msra.mxu0 0.0
    %1208 = vmatprep.subr.mxu0 0.0
    %1209 = vmatpush1.msra.mxu0 0.0
    %1210 = vmatprep.subr.mxu0 0.0
    %1211 = vmatpush1.msra.mxu0 0.0
    %1212 = vmatprep.subr.mxu0 0.0
    %1213 = vmatpush1.msra.mxu0 0.0
    %1214 = vmatprep.subr.mxu0 0.0
    %1215 = vmatpush1.msra.mxu0 0.0
    %1216 = vmatprep.subr.mxu0 0.0
    %1217 = vmatpush1.msra.mxu0 0.0
    %1218 = vmatprep.subr.mxu0 0.0
    %1219 = vmatpush1.msra.mxu0 0.0
    %1220 = vmatprep.subr.mxu0 0.0
    %1221 = vmatpush1.msra.mxu0 0.0
    %1222 = vmatprep.subr.mxu0 0.0
    %1223 = vmatpush1.msra.mxu0 0.0
    %1224 = vmatprep.subr.mxu0 0.0
    %1225 = vmatpush1.msra.mxu0 0.0
    %1226 = vmatprep.subr.mxu0 0.0
    %1227 = vmatpush1.msra.mxu0 0.0
    %1228 = vmatprep.subr.mxu0 0.0
    %1229 = vmatpush1.msra.mxu0 0.0
    %1230 = vmatprep.subr.mxu0 0.0
    %1231 = vmatpush1.msra.mxu0 0.0
    %1232 = vmatprep.subr.mxu0 0.0
    %1233 = vmatpush1.msra.mxu0 0.0
    %1234 = vmatprep.subr.mxu0 0.0
    %1235 = vmatpush1.msra.mxu0 0.0
    %1236 = vmatprep.subr.mxu0 0.0
    %1237 = vmatpush1.msra.mxu0 0.0
    %1238 = vmatprep.subr.mxu0 0.0
    %1239 = vmatpush1.msra.mxu0 0.0
    %1240 = vmatprep.subr.mxu0 0.0
    %1241 = vmatpush1.msra.mxu0 0.0
    %1242 = vmatprep.subr.mxu0 0.0
    %1243 = vmatpush1.msra.mxu0 0.0
    %1244 = vmatprep.subr.mxu0 0.0
    %1245 = vmatpush1.msra.mxu0 0.0
    %1246 = vmatprep.subr.mxu0 0.0
    %1247 = vmatpush1.msra.mxu0 0.0
    %1248 = vmatprep.subr.mxu0 0.0
    %1249 = vmatpush1.msra.mxu0 0.0
    %1250 = vmatprep.subr.mxu0 0.0
    %1251 = vmatpush1.msra.mxu0 0.0
    %1252 = vmatprep.subr.mxu0 0.0
    %1253 = vmatpush1.msra.mxu0 0.0
    %1254 = vmatprep.subr.mxu0 0.0
    %1255 = vmatpush1.msra.mxu0 0.0
    %1256 = vmatprep.subr.mxu0 0.0
    %1257 = vmatpush1.msra.mxu0 0.0
    %1258 = vmatprep.subr.mxu0 0.0
    %1259 = vmatpush1.msra.mxu0 0.0
    %1260 = vmatprep.mubr.f32.mxu0 0.0
    %v1261 = vand.u32 %v1189, 4294901760
    %v1262 = vsub.f32 %v1189, %v1261
    %v1263 = vand.u32 %v1262, 4294901760
    %v1264 = vsub.f32 %v1262, %v1263
    %v1265 = vand.u32 %v1264, 4294901760
    %1266 = vmatmul.mubr.f32.gmra.mrb[0].mxu0 %v1265
    %v1267 = vpop.f32.mrb[0].mxu0
    %v1268 = vadd.f32 0.0, %v1267
    %v1269 = vpop.f32.mrb[0].mxu0
    %1270 = vdwg.mxu0
    %1271 = vmatprep.subr.mxu0 0.0
    %v1272 = vand.u32 %v1193, 4294901760
    %v1273 = vsub.f32 %v1193, %v1272
    %v1274 = vand.u32 %v1273, 4294901760
    %v1275 = vsub.f32 %v1273, %v1274
    %v1276 = vand.u32 %v1275, 4294901760
    %1277 = vmatpush1.msra.mxu0 %v1276
    %1278 = vmatprep.subr.mxu0 0.0
    %1279 = vmatpush1.msra.mxu0 0.0
    %1280 = vmatprep.subr.mxu0 0.0
    %1281 = vmatpush1.msra.mxu0 0.0
    %1282 = vmatprep.subr.mxu0 0.0
    %1283 = vmatpush1.msra.mxu0 0.0
    %1284 = vmatprep.subr.mxu0 0.0
    %1285 = vmatpush1.msra.mxu0 0.0
    %1286 = vmatprep.subr.mxu0 0.0
    %1287 = vmatpush1.msra.mxu0 0.0
    %1288 = vmatprep.subr.mxu0 0.0
    %1289 = vmatpush1.msra.mxu0 0.0
    %1290 = vmatprep.subr.mxu0 0.0
    %1291 = vmatpush1.msra.mxu0 0.0
    %1292 = vmatprep.subr.mxu0 0.0
    %1293 = vmatpush1.msra.mxu0 0.0
    %1294 = vmatprep.subr.mxu0 0.0
    %1295 = vmatpush1.msra.mxu0 0.0
    %1296 = vmatprep.subr.mxu0 0.0
    %1297 = vmatpush1.msra.mxu0 0.0
    %1298 = vmatprep.subr.mxu0 0.0
    %1299 = vmatpush1.msra.mxu0 0.0
    %1300 = vmatprep.subr.mxu0 0.0
    %1301 = vmatpush1.msra.mxu0 0.0
    %1302 = vmatprep.subr.mxu0 0.0
    %1303 = vmatpush1.msra.mxu0 0.0
    %1304 = vmatprep.subr.mxu0 0.0
    %1305 = vmatpush1.msra.mxu0 0.0
    %1306 = vmatprep.subr.mxu0 0.0
    %1307 = vmatpush1.msra.mxu0 0.0
    %1308 = vmatprep.subr.mxu0 0.0
    %1309 = vmatpush1.msra.mxu0 0.0
    %1310 = vmatprep.subr.mxu0 0.0
    %1311 = vmatpush1.msra.mxu0 0.0
    %1312 = vmatprep.subr.mxu0 0.0
    %1313 = vmatpush1.msra.mxu0 0.0
    %1314 = vmatprep.subr.mxu0 0.0
    %1315 = vmatpush1.msra.mxu0 0.0
    %1316 = vmatprep.subr.mxu0 0.0
    %1317 = vmatpush1.msra.mxu0 0.0
    %1318 = vmatprep.subr.mxu0 0.0
    %1319 = vmatpush1.msra.mxu0 0.0
    %1320 = vmatprep.subr.mxu0 0.0
    %1321 = vmatpush1.msra.mxu0 0.0
    %1322 = vmatprep.subr.mxu0 0.0
    %1323 = vmatpush1.msra.mxu0 0.0
    %1324 = vmatprep.subr.mxu0 0.0
    %1325 = vmatpush1.msra.mxu0 0.0
    %1326 = vmatprep.subr.mxu0 0.0
    %1327 = vmatpush1.msra.mxu0 0.0
    %1328 = vmatprep.subr.mxu0 0.0
    %1329 = vmatpush1.msra.mxu0 0.0
    %1330 = vmatprep.subr.mxu0 0.0
    %1331 = vmatpush1.msra.mxu0 0.0
    %1332 = vmatprep.subr.mxu0 0.0
    %1333 = vmatpush1.msra.mxu0 0.0
    %1334 = vmatprep.subr.mxu0 0.0
    %1335 = vmatpush1.msra.mxu0 0.0
    %1336 = vmatprep.subr.mxu0 0.0
    %1337 = vmatpush1.msra.mxu0 0.0
    %1338 = vmatprep.subr.mxu0 0.0
    %1339 = vmatpush1.msra.mxu0 0.0
    %1340 = vmatprep.mubr.f32.mxu0 0.0
    %v1341 = vand.u32 %v1189, 4294901760
    %1342 = vmatmul.mubr.f32.gmra.mrb[0].mxu0 %v1341
    %v1343 = vpop.f32.mrb[0].mxu0
    %v1344 = vadd.f32 %v1268, %v1343
    %v1345 = vpop.f32.mrb[0].mxu0
    %1346 = vdwg.mxu0
    %1347 = vmatprep.subr.mxu0 0.0
    %v1348 = vand.u32 %v1193, 4294901760
    %v1349 = vsub.f32 %v1193, %v1348
    %1350 = vmatpush1.msra.mxu0 %v1349
    %1351 = vmatprep.subr.mxu0 0.0
    %1352 = vmatpush1.msra.mxu0 0.0
    %1353 = vmatprep.subr.mxu0 0.0
    %1354 = vmatpush1.msra.mxu0 0.0
    %1355 = vmatprep.subr.mxu0 0.0
    %1356 = vmatpush1.msra.mxu0 0.0
    %1357 = vmatprep.subr.mxu0 0.0
    %1358 = vmatpush1.msra.mxu0 0.0
    %1359 = vmatprep.subr.mxu0 0.0
    %1360 = vmatpush1.msra.mxu0 0.0
    %1361 = vmatprep.subr.mxu0 0.0
    %1362 = vmatpush1.msra.mxu0 0.0
    %1363 = vmatprep.subr.mxu0 0.0
    %1364 = vmatpush1.msra.mxu0 0.0
    %1365 = vmatprep.subr.mxu0 0.0
    %1366 = vmatpush1.msra.mxu0 0.0
    %1367 = vmatprep.subr.mxu0 0.0
    %1368 = vmatpush1.msra.mxu0 0.0
    %1369 = vmatprep.subr.mxu0 0.0
    %1370 = vmatpush1.msra.mxu0 0.0
    %1371 = vmatprep.subr.mxu0 0.0
    %1372 = vmatpush1.msra.mxu0 0.0
    %1373 = vmatprep.subr.mxu0 0.0
    %1374 = vmatpush1.msra.mxu0 0.0
    %1375 = vmatprep.subr.mxu0 0.0
    %1376 = vmatpush1.msra.mxu0 0.0
    %1377 = vmatprep.subr.mxu0 0.0
    %1378 = vmatpush1.msra.mxu0 0.0
    %1379 = vmatprep.subr.mxu0 0.0
    %1380 = vmatpush1.msra.mxu0 0.0
    %1381 = vmatprep.subr.mxu0 0.0
    %1382 = vmatpush1.msra.mxu0 0.0
    %1383 = vmatprep.subr.mxu0 0.0
    %1384 = vmatpush1.msra.mxu0 0.0
    %1385 = vmatprep.subr.mxu0 0.0
    %1386 = vmatpush1.msra.mxu0 0.0
    %1387 = vmatprep.subr.mxu0 0.0
    %1388 = vmatpush1.msra.mxu0 0.0
    %1389 = vmatprep.subr.mxu0 0.0
    %1390 = vmatpush1.msra.mxu0 0.0
    %1391 = vmatprep.subr.mxu0 0.0
    %1392 = vmatpush1.msra.mxu0 0.0
    %1393 = vmatprep.subr.mxu0 0.0
    %1394 = vmatpush1.msra.mxu0 0.0
    %1395 = vmatprep.subr.mxu0 0.0
    %1396 = vmatpush1.msra.mxu0 0.0
    %1397 = vmatprep.subr.mxu0 0.0
    %1398 = vmatpush1.msra.mxu0 0.0
    %1399 = vmatprep.subr.mxu0 0.0
    %1400 = vmatpush1.msra.mxu0 0.0
    %1401 = vmatprep.subr.mxu0 0.0
    %1402 = vmatpush1.msra.mxu0 0.0
    %1403 = vmatprep.subr.mxu0 0.0
    %1404 = vmatpush1.msra.mxu0 0.0
    %1405 = vmatprep.subr.mxu0 0.0
    %1406 = vmatpush1.msra.mxu0 0.0
    %1407 = vmatprep.subr.mxu0 0.0
    %1408 = vmatpush1.msra.mxu0 0.0
    %1409 = vmatprep.subr.mxu0 0.0
    %1410 = vmatpush1.msra.mxu0 0.0
    %1411 = vmatprep.subr.mxu0 0.0
    %1412 = vmatpush1.msra.mxu0 0.0
    %1413 = vmatprep.mubr.f32.mxu0 0.0
    %v1414 = vand.u32 %v1189, 4294901760
    %v1415 = vsub.f32 %v1189, %v1414
    %1416 = vmatmul.mubr.f32.gmra.mrb[0].mxu0 %v1415
    %v1417 = vpop.f32.mrb[0].mxu0
    %v1418 = vadd.f32 %v1344, %v1417
    %v1419 = vpop.f32.mrb[0].mxu0
    %1420 = vdwg.mxu0
    %1421 = vmatprep.subr.mxu0 0.0
    %v1422 = vand.u32 %v1193, 4294901760
    %1423 = vmatpush1.msra.mxu0 %v1422
    %1424 = vmatprep.subr.mxu0 0.0
    %1425 = vmatpush1.msra.mxu0 0.0
    %1426 = vmatprep.subr.mxu0 0.0
    %1427 = vmatpush1.msra.mxu0 0.0
    %1428 = vmatprep.subr.mxu0 0.0
    %1429 = vmatpush1.msra.mxu0 0.0
    %1430 = vmatprep.subr.mxu0 0.0
    %1431 = vmatpush1.msra.mxu0 0.0
    %1432 = vmatprep.subr.mxu0 0.0
    %1433 = vmatpush1.msra.mxu0 0.0
    %1434 = vmatprep.subr.mxu0 0.0
    %1435 = vmatpush1.msra.mxu0 0.0
    %1436 = vmatprep.subr.mxu0 0.0
    %1437 = vmatpush1.msra.mxu0 0.0
    %1438 = vmatprep.subr.mxu0 0.0
    %1439 = vmatpush1.msra.mxu0 0.0
    %1440 = vmatprep.subr.mxu0 0.0
    %1441 = vmatpush1.msra.mxu0 0.0
    %1442 = vmatprep.subr.mxu0 0.0
    %1443 = vmatpush1.msra.mxu0 0.0
    %1444 = vmatprep.subr.mxu0 0.0
    %1445 = vmatpush1.msra.mxu0 0.0
    %1446 = vmatprep.subr.mxu0 0.0
    %1447 = vmatpush1.msra.mxu0 0.0
    %1448 = vmatprep.subr.mxu0 0.0
    %1449 = vmatpush1.msra.mxu0 0.0
    %1450 = vmatprep.subr.mxu0 0.0
    %1451 = vmatpush1.msra.mxu0 0.0
    %1452 = vmatprep.subr.mxu0 0.0
    %1453 = vmatpush1.msra.mxu0 0.0
    %1454 = vmatprep.subr.mxu0 0.0
    %1455 = vmatpush1.msra.mxu0 0.0
    %1456 = vmatprep.subr.mxu0 0.0
    %1457 = vmatpush1.msra.mxu0 0.0
    %1458 = vmatprep.subr.mxu0 0.0
    %1459 = vmatpush1.msra.mxu0 0.0
    %1460 = vmatprep.subr.mxu0 0.0
    %1461 = vmatpush1.msra.mxu0 0.0
    %1462 = vmatprep.subr.mxu0 0.0
    %1463 = vmatpush1.msra.mxu0 0.0
    %1464 = vmatprep.subr.mxu0 0.0
    %1465 = vmatpush1.msra.mxu0 0.0
    %1466 = vmatprep.subr.mxu0 0.0
    %1467 = vmatpush1.msra.mxu0 0.0
    %1468 = vmatprep.subr.mxu0 0.0
    %1469 = vmatpush1.msra.mxu0 0.0
    %1470 = vmatprep.subr.mxu0 0.0
    %1471 = vmatpush1.msra.mxu0 0.0
    %1472 = vmatprep.subr.mxu0 0.0
    %1473 = vmatpush1.msra.mxu0 0.0
    %1474 = vmatprep.subr.mxu0 0.0
    %1475 = vmatpush1.msra.mxu0 0.0
    %1476 = vmatprep.subr.mxu0 0.0
    %1477 = vmatpush1.msra.mxu0 0.0
    %1478 = vmatprep.subr.mxu0 0.0
    %1479 = vmatpush1.msra.mxu0 0.0
    %1480 = vmatprep.subr.mxu0 0.0
    %1481 = vmatpush1.msra.mxu0 0.0
    %1482 = vmatprep.subr.mxu0 0.0
    %1483 = vmatpush1.msra.mxu0 0.0
    %1484 = vmatprep.subr.mxu0 0.0
    %1485 = vmatpush1.msra.mxu0 0.0
    %1486 = vmatprep.mubr.f32.mxu0 0.0
    %v1487 = vand.u32 %v1189, 4294901760
    %v1488 = vsub.f32 %v1189, %v1487
    %v1489 = vand.u32 %v1488, 4294901760
    %1490 = vmatmul.mubr.f32.gmra.mrb[0].mxu0 %v1489
    %v1491 = vpop.f32.mrb[0].mxu0
    %v1492 = vadd.f32 %v1418, %v1491
    %v1493 = vpop.f32.mrb[0].mxu0
    %1494 = vdwg.mxu0
    %1495 = vmatprep.subr.mxu0 0.0
    %v1496 = vand.u32 %v1193, 4294901760
    %v1497 = vsub.f32 %v1193, %v1496
    %v1498 = vand.u32 %v1497, 4294901760
    %1499 = vmatpush1.msra.mxu0 %v1498
    %1500 = vmatprep.subr.mxu0 0.0
    %1501 = vmatpush1.msra.mxu0 0.0
    %1502 = vmatprep.subr.mxu0 0.0
    %1503 = vmatpush1.msra.mxu0 0.0
    %1504 = vmatprep.subr.mxu0 0.0
    %1505 = vmatpush1.msra.mxu0 0.0
    %1506 = vmatprep.subr.mxu0 0.0
    %1507 = vmatpush1.msra.mxu0 0.0
    %1508 = vmatprep.subr.mxu0 0.0
    %1509 = vmatpush1.msra.mxu0 0.0
    %1510 = vmatprep.subr.mxu0 0.0
    %1511 = vmatpush1.msra.mxu0 0.0
    %1512 = vmatprep.subr.mxu0 0.0
    %1513 = vmatpush1.msra.mxu0 0.0
    %1514 = vmatprep.subr.mxu0 0.0
    %1515 = vmatpush1.msra.mxu0 0.0
    %1516 = vmatprep.subr.mxu0 0.0
    %1517 = vmatpush1.msra.mxu0 0.0
    %1518 = vmatprep.subr.mxu0 0.0
    %1519 = vmatpush1.msra.mxu0 0.0
    %1520 = vmatprep.subr.mxu0 0.0
    %1521 = vmatpush1.msra.mxu0 0.0
    %1522 = vmatprep.subr.mxu0 0.0
    %1523 = vmatpush1.msra.mxu0 0.0
    %1524 = vmatprep.subr.mxu0 0.0
    %1525 = vmatpush1.msra.mxu0 0.0
    %1526 = vmatprep.subr.mxu0 0.0
    %1527 = vmatpush1.msra.mxu0 0.0
    %1528 = vmatprep.subr.mxu0 0.0
    %1529 = vmatpush1.msra.mxu0 0.0
    %1530 = vmatprep.subr.mxu0 0.0
    %1531 = vmatpush1.msra.mxu0 0.0
    %1532 = vmatprep.subr.mxu0 0.0
    %1533 = vmatpush1.msra.mxu0 0.0
    %1534 = vmatprep.subr.mxu0 0.0
    %1535 = vmatpush1.msra.mxu0 0.0
    %1536 = vmatprep.subr.mxu0 0.0
    %1537 = vmatpush1.msra.mxu0 0.0
    %1538 = vmatprep.subr.mxu0 0.0
    %1539 = vmatpush1.msra.mxu0 0.0
    %1540 = vmatprep.subr.mxu0 0.0
    %1541 = vmatpush1.msra.mxu0 0.0
    %1542 = vmatprep.subr.mxu0 0.0
    %1543 = vmatpush1.msra.mxu0 0.0
    %1544 = vmatprep.subr.mxu0 0.0
    %1545 = vmatpush1.msra.mxu0 0.0
    %1546 = vmatprep.subr.mxu0 0.0
    %1547 = vmatpush1.msra.mxu0 0.0
    %1548 = vmatprep.subr.mxu0 0.0
    %1549 = vmatpush1.msra.mxu0 0.0
    %1550 = vmatprep.subr.mxu0 0.0
    %1551 = vmatpush1.msra.mxu0 0.0
    %1552 = vmatprep.subr.mxu0 0.0
    %1553 = vmatpush1.msra.mxu0 0.0
    %1554 = vmatprep.subr.mxu0 0.0
    %1555 = vmatpush1.msra.mxu0 0.0
    %1556 = vmatprep.subr.mxu0 0.0
    %1557 = vmatpush1.msra.mxu0 0.0
    %1558 = vmatprep.subr.mxu0 0.0
    %1559 = vmatpush1.msra.mxu0 0.0
    %1560 = vmatprep.subr.mxu0 0.0
    %1561 = vmatpush1.msra.mxu0 0.0
    %1562 = vmatprep.mubr.f32.mxu0 0.0
    %v1563 = vand.u32 %v1189, 4294901760
    %1564 = vmatmul.mubr.f32.gmra.mrb[0].mxu0 %v1563
    %v1565 = vpop.f32.mrb[0].mxu0
    %v1566 = vadd.f32 %v1492, %v1565
    %v1567 = vpop.f32.mrb[0].mxu0
    %1568 = vdwg.mxu0
    %1569 = vmatprep.subr.mxu0 0.0
    %v1570 = vand.u32 %v1193, 4294901760
    %1571 = vmatpush1.msra.mxu0 %v1570
    %1572 = vmatprep.subr.mxu0 0.0
    %1573 = vmatpush1.msra.mxu0 0.0
    %1574 = vmatprep.subr.mxu0 0.0
    %1575 = vmatpush1.msra.mxu0 0.0
    %1576 = vmatprep.subr.mxu0 0.0
    %1577 = vmatpush1.msra.mxu0 0.0
    %1578 = vmatprep.subr.mxu0 0.0
    %1579 = vmatpush1.msra.mxu0 0.0
    %1580 = vmatprep.subr.mxu0 0.0
    %1581 = vmatpush1.msra.mxu0 0.0
    %1582 = vmatprep.subr.mxu0 0.0
    %1583 = vmatpush1.msra.mxu0 0.0
    %1584 = vmatprep.subr.mxu0 0.0
    %1585 = vmatpush1.msra.mxu0 0.0
    %1586 = vmatprep.subr.mxu0 0.0
    %1587 = vmatpush1.msra.mxu0 0.0
    %1588 = vmatprep.subr.mxu0 0.0
    %1589 = vmatpush1.msra.mxu0 0.0
    %1590 = vmatprep.subr.mxu0 0.0
    %1591 = vmatpush1.msra.mxu0 0.0
    %1592 = vmatprep.subr.mxu0 0.0
    %1593 = vmatpush1.msra.mxu0 0.0
    %1594 = vmatprep.subr.mxu0 0.0
    %1595 = vmatpush1.msra.mxu0 0.0
    %1596 = vmatprep.subr.mxu0 0.0
    %1597 = vmatpush1.msra.mxu0 0.0
    %1598 = vmatprep.subr.mxu0 0.0
    %1599 = vmatpush1.msra.mxu0 0.0
    %1600 = vmatprep.subr.mxu0 0.0
    %1601 = vmatpush1.msra.mxu0 0.0
    %1602 = vmatprep.subr.mxu0 0.0
    %1603 = vmatpush1.msra.mxu0 0.0
    %1604 = vmatprep.subr.mxu0 0.0
    %1605 = vmatpush1.msra.mxu0 0.0
    %1606 = vmatprep.subr.mxu0 0.0
    %1607 = vmatpush1.msra.mxu0 0.0
    %1608 = vmatprep.subr.mxu0 0.0
    %1609 = vmatpush1.msra.mxu0 0.0
    %1610 = vmatprep.subr.mxu0 0.0
    %1611 = vmatpush1.msra.mxu0 0.0
    %1612 = vmatprep.subr.mxu0 0.0
    %1613 = vmatpush1.msra.mxu0 0.0
    %1614 = vmatprep.subr.mxu0 0.0
    %1615 = vmatpush1.msra.mxu0 0.0
    %1616 = vmatprep.subr.mxu0 0.0
    %1617 = vmatpush1.msra.mxu0 0.0
    %1618 = vmatprep.subr.mxu0 0.0
    %1619 = vmatpush1.msra.mxu0 0.0
    %1620 = vmatprep.subr.mxu0 0.0
    %1621 = vmatpush1.msra.mxu0 0.0
    %1622 = vmatprep.subr.mxu0 0.0
    %1623 = vmatpush1.msra.mxu0 0.0
    %1624 = vmatprep.subr.mxu0 0.0
    %1625 = vmatpush1.msra.mxu0 0.0
    %1626 = vmatprep.subr.mxu0 0.0
    %1627 = vmatpush1.msra.mxu0 0.0
    %1628 = vmatprep.subr.mxu0 0.0
    %1629 = vmatpush1.msra.mxu0 0.0
    %1630 = vmatprep.subr.mxu0 0.0
    %1631 = vmatpush1.msra.mxu0 0.0
    %1632 = vmatprep.subr.mxu0 0.0
    %1633 = vmatpush1.msra.mxu0 0.0
    %1634 = vmatprep.mubr.f32.mxu0 0.0
    %v1635 = vand.u32 %v1189, 4294901760
    %1636 = vmatmul.mubr.f32.gmra.mrb[0].mxu0 %v1635
    %v1637 = vpop.f32.mrb[0].mxu0
    %v1638 = vadd.f32 %v1566, %v1637
    %v1639 = vpop.f32.mrb[0].mxu0
    %1640 = vdwg.mxu0
    %v1641 = vxor.u32 %v1638, 2147483648
    %v1642 = vmul.f32 %v1641, 1.442695
    %v1643 = vpow.pop %v1642
    %v1644 = vadd.f32 %v1643, 1.0
    %v1645 = vrcp.pop %v1644
    %v1646 = vmul.f32 1.0, %v1645
    %vm1647 = vcmask 254976
    %1648 = vst.msk [vmem:[#allocation5] sm:$0x3] %vm1647, %v1646
    // Predicated region
    $region18: #{tpu_custom_call.1} parent=1 // pred_check
      _
    $region19: #{tpu_custom_call.1} parent=1 // pred_check_branch
      %1650 = sbr.rel (0) target = $region21
    $region20: #{tpu_custom_call.1} parent=1 // pred_region
      %s1652 = ssub.s32 32, 32
      %1653 = vsyncadd [#allocation4], %s1652
      %s1655 = sshll.u32 [#allocation5], 4
      %s1656 = int_to_ptr.vmem [resolvable:$true] %s1655
      %1658 = dma.vmem_to_hbm [thread:$0]  %s1656, 32, %s3, [#allocation4]
    $region21: #{tpu_custom_call.1} parent=1 // pred_fallthru
      _
    // Predicated region
    $region22: #{tpu_custom_call.1} parent=1 // pred_check
      _
    $region23: #{tpu_custom_call.1} parent=1 // pred_check_branch
      %1660 = sbr.rel (0) target = $region25
    $region24: #{tpu_custom_call.1} parent=1 // pred_region
      %1661 = dma.done [#allocation4], 32
    $region25: #{tpu_custom_call.1} parent=1 // pred_fallthru
      _
    %1662 = vsyncpa [#allocation3], 1
    %1663 = vsyncpa [#allocation4], 1

</llo_original>
